<compile_context>
chip_gen: v7x
topology: tpu7x:2x2x1
jax: 0.10.0
libtpu: 0.0.40
codegen_flags: <defaults>
</compile_context>

<pallas_src>
import functools

import jax
import jax.numpy as jnp
from jax.experimental import pallas as pl
from jax.experimental.pallas import tpu as pltpu

# ----------------------- small synthetic GPTNeoXConfig -----------------------
SEQ = 8
HIDDEN = 32
NUM_HEADS = 4
HEAD_SIZE = HIDDEN // NUM_HEADS            # 8
INTERMEDIATE = 4 * HIDDEN                  # 128
ROTARY_PCT = 0.25
ROTARY_DIM = int(HEAD_SIZE * ROTARY_PCT)   # 2 (must be even)
ROPE_THETA = 10000.0
LN_EPS = 1e-5
USE_PARALLEL_RESIDUAL = True
SCALE = HEAD_SIZE ** -0.5
_SQRT2 = 1.4142135623730951


# ------------------------------ in-kernel math -------------------------------
def _erf(x):
    # Abramowitz & Stegun 7.1.26 rational approximation (|err| <= 1.5e-7).
    a1, a2, a3, a4, a5 = (0.254829592, -0.284496736, 1.421413741,
                          -1.453152027, 1.061405429)
    p = 0.3275911
    sign = jnp.where(x >= 0.0, 1.0, -1.0)
    ax = jnp.abs(x)
    t = 1.0 / (1.0 + p * ax)
    poly = ((((a5 * t + a4) * t + a3) * t + a2) * t + a1) * t
    y = 1.0 - poly * jnp.exp(-ax * ax)
    return sign * y


def _gelu_exact(x):
    # torch.nn.GELU() default (erf-based, NOT tanh approximation)
    return 0.5 * x * (1.0 + _erf(x / _SQRT2))


# ------------------------------ fused kernel ---------------------------------
def gpt_neox_layer_kernel(x_ref, cos_ref, sinlo_ref, sinhi_ref,
                          ln1g_ref, ln1b_ref, ln2g_ref, ln2b_ref,
                          wqkv_ref, bqkv_ref, wd_ref, bd_ref,
                          w1_ref, b1_ref, w2_ref, b2_ref,
                          o_ref, *, parallel_residual):
    x = x_ref[...].astype(jnp.float32)          # (T, H)
    T = x.shape[0]

    def ln(v, g_ref, b_ref):
        mu = jnp.mean(v, axis=-1, keepdims=True)
        var = jnp.mean(jnp.square(v - mu), axis=-1, keepdims=True)
        return (v - mu) * jax.lax.rsqrt(var + LN_EPS) * g_ref[...] + b_ref[...]

    def dense(v, w_ref, b_ref):
        return jnp.dot(v, w_ref[...],
                       preferred_element_type=jnp.float32) + b_ref[...]

    # ---------------- attention branch ----------------
    attn_in = ln(x, ln1g_ref, ln1b_ref)
    qkv = dense(attn_in, wqkv_ref, bqkv_ref)    # (T, 3H), one MXU pass
    q = qkv[:, :HIDDEN]
    k = qkv[:, HIDDEN:2 * HIDDEN]
    v = qkv[:, 2 * HIDDEN:]

    # Full-width NeoX partial RoPE: precomputed (T, H) tables; rotate-half is
    # two global lane shifts weighted by ±sin masks (zero outside rotary dims,
    # so wraparound values never contribute).
    cos = cos_ref[...]
    sin_lo = sinlo_ref[...]
    sin_hi = sinhi_ref[...]
    half = ROTARY_DIM // 2

    def rope(u):
        return (u * cos
                + jnp.roll(u, -half, axis=1) * sin_lo
                + jnp.roll(u, half, axis=1) * sin_hi)

    q = rope(q)
    k = rope(k)

    # Head-batched attention: heads on the leading (batch) dim so the einsums
    # lower to batched dot_general with no in-kernel transposes.
    def split_heads(u):                          # (T, H) -> (NH, T, HD)
        return jnp.stack(
            [u[:, h * HEAD_SIZE:(h + 1) * HEAD_SIZE] for h in range(NUM_HEADS)],
            axis=0)

    qh, kh, vh = split_heads(q), split_heads(k), split_heads(v)

    row = jax.lax.broadcasted_iota(jnp.int32, (T, T), 0)
    col = jax.lax.broadcasted_iota(jnp.int32, (T, T), 1)
    causal = (row >= col)[None]                  # (1, T, T)

    s = jnp.einsum('htd,hsd->hts', qh, kh,
                   preferred_element_type=jnp.float32) * SCALE
    s = jnp.where(causal, s, jnp.float32(-1e30))  # f32 only; safe
    m = jnp.max(s, axis=-1, keepdims=True)
    p = jnp.exp(s - m)
    p = p * pl.reciprocal(jnp.sum(p, axis=-1, keepdims=True), approx=True)
    ctx = jnp.einsum('hts,hsd->htd', p, vh,
                     preferred_element_type=jnp.float32)      # (NH, T, HD)
    ctx = jnp.concatenate([ctx[h] for h in range(NUM_HEADS)], axis=-1)  # (T,H)
    attn_out = dense(ctx, wd_ref, bd_ref)

    # ---------------- MLP branch + residuals ----------------
    def mlp(v):
        return dense(_gelu_exact(dense(v, w1_ref, b1_ref)), w2_ref, b2_ref)

    if parallel_residual:
        mlp_out = mlp(ln(x, ln2g_ref, ln2b_ref))
        out = mlp_out + attn_out + x
    else:
        attn_res = attn_out + x
        mlp_out = mlp(ln(attn_res, ln2g_ref, ln2b_ref))
        out = mlp_out + attn_res

    # Single full-width store of the layer output.
    o_ref[...] = out.astype(o_ref.dtype)


# ------------------------------ pallas wrapper --------------------------------
def _rope_cos_sin(position_ids):
    inv_freq = 1.0 / (ROPE_THETA ** (
        jnp.arange(0, ROTARY_DIM, 2, dtype=jnp.float32) / ROTARY_DIM))
    freqs = position_ids.astype(jnp.float32)[:, None] * inv_freq[None, :]
    return jnp.cos(freqs), jnp.sin(freqs)        # (T, ROTARY_DIM // 2)


def _rope_full_tables(position_ids):
    """Full-width (T, HIDDEN) tables: cos / -sin (first half) / +sin (second)."""
    T = position_ids.shape[0]
    half = ROTARY_DIM // 2
    cos, sin = _rope_cos_sin(position_ids)
    pad = HEAD_SIZE - ROTARY_DIM
    ones_pad = jnp.ones((T, pad), jnp.float32)
    zeros_pad = jnp.zeros((T, pad), jnp.float32)
    zeros_half = jnp.zeros((T, half), jnp.float32)
    cos_head = jnp.concatenate([cos, cos, ones_pad], axis=-1)        # (T, HD)
    sin_lo_head = jnp.concatenate([-sin, zeros_half, zeros_pad], axis=-1)
    sin_hi_head = jnp.concatenate([zeros_half, sin, zeros_pad], axis=-1)
    tile = lambda a: jnp.tile(a, (1, NUM_HEADS))                     # (T, H)
    return tile(cos_head), tile(sin_lo_head), tile(sin_hi_head)


def gpt_neox_layer(position_ids, hidden_states, params):
    """Fused forward pass of GPTNeoXLayer (prefill / no KV cache)."""
    T, H = hidden_states.shape
    I = INTERMEDIATE
    cos_full, sin_lo, sin_hi = _rope_full_tables(position_ids)

    kernel = functools.partial(gpt_neox_layer_kernel,
                               parallel_residual=USE_PARALLEL_RESIDUAL)

    def full(shape):
        return pl.BlockSpec(shape, lambda i: (0, 0))

    in_specs = [
        full((T, H)),                 # hidden_states
        full((T, H)), full((T, H)), full((T, H)),   # rope tables
        full((1, H)), full((1, H)), full((1, H)), full((1, H)),  # LN params
        full((H, 3 * H)), full((1, 3 * H)),          # qkv
        full((H, H)), full((1, H)),                  # dense
        full((H, I)), full((1, I)),                  # fc1
        full((I, H)), full((1, H)),                  # fc2
    ]

    flops = (2 * T * H * 3 * H          # qkv
             + 2 * T * H * H            # dense
             + 2 * T * H * I            # fc1
             + 2 * T * I * H            # fc2
             + 4 * NUM_HEADS * T * T * HEAD_SIZE)   # scores + context
    transcendentals = NUM_HEADS * T * T + T * I + 4 * T
    bytes_accessed = 4 * (5 * T * H                       # x, tables, out
                          + H * 3 * H + 3 * H             # qkv w/b
                          + H * H + H                     # dense w/b
                          + H * I + I + I * H + H         # mlp w/b
                          + 4 * H)                        # LN params

    return pl.pallas_call(
        kernel,
        out_shape=jax.ShapeDtypeStruct((T, H), hidden_states.dtype),
        grid=(1,),
        in_specs=in_specs,
        out_specs=full((T, H)),
        compiler_params=pltpu.CompilerParams(
            dimension_semantics=("arbitrary",)),
        cost_estimate=pl.CostEstimate(flops=flops,
                                      transcendentals=transcendentals,
                                      bytes_accessed=bytes_accessed),
    )(hidden_states, cos_full, sin_lo, sin_hi,
      params["ln1_g"].reshape(1, H), params["ln1_b"].reshape(1, H),
      params["ln2_g"].reshape(1, H), params["ln2_b"].reshape(1, H),
      params["w_qkv"], params["b_qkv"].reshape(1, 3 * H),
      params["w_dense"], params["b_dense"].reshape(1, H),
      params["w_fc1"], params["b_fc1"].reshape(1, I),
      params["w_fc2"], params["b_fc2"].reshape(1, H))


# ---------------------------- pure-JAX reference -------------------------------
def reference_layer(position_ids, hidden_states, params):
    def ln(x, g, b):
        x32 = x.astype(jnp.float32)
        mu = x32.mean(-1, keepdims=True)
        var = ((x32 - mu) ** 2).mean(-1, keepdims=True)
        return (x32 - mu) / jnp.sqrt(var + LN_EPS) * g + b

    def rope(x, cos, sin):  # x: (T, NH, HD)
        half = ROTARY_DIM // 2
        x1, x2 = x[..., :half], x[..., half:ROTARY_DIM]
        c, s = cos[:, None, :], sin[:, None, :]
        return jnp.concatenate(
            [x1 * c - x2 * s, x2 * c + x1 * s, x[..., ROTARY_DIM:]], axis=-1)

    T = hidden_states.shape[0]
    attn_in = ln(hidden_states, params["ln1_g"], params["ln1_b"])
    qkv = attn_in @ params["w_qkv"] + params["b_qkv"]
    q, k, v = jnp.split(qkv, 3, -1)
    q = q.reshape(T, NUM_HEADS, HEAD_SIZE)
    k = k.reshape(T, NUM_HEADS, HEAD_SIZE)
    v = v.reshape(T, NUM_HEADS, HEAD_SIZE)
    cos, sin = _rope_cos_sin(position_ids)
    q, k = rope(q, cos, sin), rope(k, cos, sin)
    scores = jnp.einsum("qhd,khd->hqk", q, k) * SCALE
    mask = jnp.tril(jnp.ones((T, T), bool))
    scores = jnp.where(mask[None], scores, -1e30)
    p = jax.nn.softmax(scores, axis=-1)
    ctx = jnp.einsum("hqk,khd->qhd", p, v).reshape(T, HIDDEN)
    attn_out = ctx @ params["w_dense"] + params["b_dense"]

    def mlp(x):
        h = jax.nn.gelu(x @ params["w_fc1"] + params["b_fc1"],
                        approximate=False)
        return h @ params["w_fc2"] + params["b_fc2"]

    if USE_PARALLEL_RESIDUAL:
        mlp_out = mlp(ln(hidden_states, params["ln2_g"], params["ln2_b"]))
        return mlp_out + attn_out + hidden_states
    else:
        attn_res = attn_out + hidden_states
        mlp_out = mlp(ln(attn_res, params["ln2_g"], params["ln2_b"]))
        return mlp_out + attn_res


# ------------------------------------ main -------------------------------------
def make_params(key):
    ks = jax.random.split(key, 12)
    def w(k, shape, scale=0.02):
        return scale * jax.random.normal(k, shape, jnp.float32)
    # Linear weights stored directly as (in, out) == torch (out, in) transposed.
    return {
        "ln1_g": 1.0 + w(ks[0], (HIDDEN,), 0.1),
        "ln1_b": w(ks[1], (HIDDEN,)),
        "ln2_g": 1.0 + w(ks[2], (HIDDEN,), 0.1),
        "ln2_b": w(ks[3], (HIDDEN,)),
        "w_qkv": w(ks[4], (HIDDEN, 3 * HIDDEN)),
        "b_qkv": w(ks[5], (3 * HIDDEN,)),
        "w_dense": w(ks[6], (HIDDEN, HIDDEN)),
        "b_dense": w(ks[7], (HIDDEN,)),
        "w_fc1": w(ks[8], (HIDDEN, INTERMEDIATE)),
        "b_fc1": w(ks[9], (INTERMEDIATE,)),
        "w_fc2": w(ks[10], (INTERMEDIATE, HIDDEN)),
        "b_fc2": w(ks[11], (HIDDEN,)),
    }


if __name__ == "__main__":
    root = jax.random.PRNGKey(0)
    k_param, k_x = jax.random.split(root)
    params = make_params(k_param)
    hidden_states = jax.random.normal(k_x, (SEQ, HIDDEN), jnp.float32)
    position_ids = jnp.arange(SEQ, dtype=jnp.int32)

    fwd = jax.jit(gpt_neox_layer)
    out = jax.block_until_ready(fwd(position_ids, hidden_states, params))

    ref = reference_layer(position_ids, hidden_states, params)
    assert out.shape == (SEQ, HIDDEN) and out.dtype == jnp.float32
    max_err = float(jnp.max(jnp.abs(out - ref)))
    assert jnp.allclose(out, ref, rtol=1e-3, atol=1e-3), max_err
    print("KERNEL_OK")
</pallas_src>

<mosaic_0001>
module attributes {stable_mosaic.version = 11 : i64} {
  func.func @gpt_neox_layer_kernel(%arg0: i32, %arg1: memref<8x32xf32, #tpu.memory_space<vmem>>, %arg2: memref<8x32xf32, #tpu.memory_space<vmem>>, %arg3: memref<8x32xf32, #tpu.memory_space<vmem>>, %arg4: memref<8x32xf32, #tpu.memory_space<vmem>>, %arg5: memref<1x32xf32, #tpu.memory_space<vmem>>, %arg6: memref<1x32xf32, #tpu.memory_space<vmem>>, %arg7: memref<1x32xf32, #tpu.memory_space<vmem>>, %arg8: memref<1x32xf32, #tpu.memory_space<vmem>>, %arg9: memref<32x96xf32, #tpu.memory_space<vmem>>, %arg10: memref<1x96xf32, #tpu.memory_space<vmem>>, %arg11: memref<32x32xf32, #tpu.memory_space<vmem>>, %arg12: memref<1x32xf32, #tpu.memory_space<vmem>>, %arg13: memref<32x128xf32, #tpu.memory_space<vmem>>, %arg14: memref<1x128xf32, #tpu.memory_space<vmem>>, %arg15: memref<128x32xf32, #tpu.memory_space<vmem>>, %arg16: memref<1x32xf32, #tpu.memory_space<vmem>>, %arg17: memref<8x32xf32, #tpu.memory_space<vmem>>) attributes {dimension_semantics = [#tpu.dimension_semantics<arbitrary>], iteration_bounds = array<i64: 1>, scalar_prefetch = 0 : i64, scratch_operands = 0 : i64, tpu.core_type = #tpu.core_type<tc>, window_params = [{pipeline_mode = #tpu.pipeline_mode<synchronous>, transform_indices = @transform_0, window_bounds = array<i64: 8, 32>}, {pipeline_mode = #tpu.pipeline_mode<synchronous>, transform_indices = @transform_1, window_bounds = array<i64: 8, 32>}, {pipeline_mode = #tpu.pipeline_mode<synchronous>, transform_indices = @transform_2, window_bounds = array<i64: 8, 32>}, {pipeline_mode = #tpu.pipeline_mode<synchronous>, transform_indices = @transform_3, window_bounds = array<i64: 8, 32>}, {pipeline_mode = #tpu.pipeline_mode<synchronous>, transform_indices = @transform_4, window_bounds = array<i64: 1, 32>}, {pipeline_mode = #tpu.pipeline_mode<synchronous>, transform_indices = @transform_5, window_bounds = array<i64: 1, 32>}, {pipeline_mode = #tpu.pipeline_mode<synchronous>, transform_indices = @transform_6, window_bounds = array<i64: 1, 32>}, {pipeline_mode = #tpu.pipeline_mode<synchronous>, transform_indices = @transform_7, window_bounds = array<i64: 1, 32>}, {pipeline_mode = #tpu.pipeline_mode<synchronous>, transform_indices = @transform_8, window_bounds = array<i64: 32, 96>}, {pipeline_mode = #tpu.pipeline_mode<synchronous>, transform_indices = @transform_9, window_bounds = array<i64: 1, 96>}, {pipeline_mode = #tpu.pipeline_mode<synchronous>, transform_indices = @transform_10, window_bounds = array<i64: 32, 32>}, {pipeline_mode = #tpu.pipeline_mode<synchronous>, transform_indices = @transform_11, window_bounds = array<i64: 1, 32>}, {pipeline_mode = #tpu.pipeline_mode<synchronous>, transform_indices = @transform_12, window_bounds = array<i64: 32, 128>}, {pipeline_mode = #tpu.pipeline_mode<synchronous>, transform_indices = @transform_13, window_bounds = array<i64: 1, 128>}, {pipeline_mode = #tpu.pipeline_mode<synchronous>, transform_indices = @transform_14, window_bounds = array<i64: 128, 32>}, {pipeline_mode = #tpu.pipeline_mode<synchronous>, transform_indices = @transform_15, window_bounds = array<i64: 1, 32>}, {pipeline_mode = #tpu.pipeline_mode<synchronous>, transform_indices = @transform_16, window_bounds = array<i64: 8, 32>}]} {
    %c0 = arith.constant 0 : index
    %c0_0 = arith.constant 0 : index
    %0 = vector.load %arg1[%c0, %c0_0] : memref<8x32xf32, #tpu.memory_space<vmem>>, vector<8x32xf32>
    %cst = arith.constant dense<0.000000e+00> : vector<8xf32>
    %1 = vector.multi_reduction <add>, %0, %cst [1] : vector<8x32xf32> to vector<8xf32>
    %2 = vector.shape_cast %1 : vector<8xf32> to vector<8x1xf32>
    %cst_1 = arith.constant 3.200000e+01 : f32
    %3 = vector.broadcast %cst_1 : f32 to vector<8x1xf32>
    %4 = arith.divf %2, %3 : vector<8x1xf32>
    %5 = vector.broadcast %4 : vector<8x1xf32> to vector<8x32xf32>
    %6 = arith.subf %0, %5 : vector<8x32xf32>
    %7 = arith.mulf %6, %6 : vector<8x32xf32>
    %cst_2 = arith.constant dense<0.000000e+00> : vector<8xf32>
    %8 = vector.multi_reduction <add>, %7, %cst_2 [1] : vector<8x32xf32> to vector<8xf32>
    %9 = vector.shape_cast %8 : vector<8xf32> to vector<8x1xf32>
    %cst_3 = arith.constant 3.200000e+01 : f32
    %10 = vector.broadcast %cst_3 : f32 to vector<8x1xf32>
    %11 = arith.divf %9, %10 : vector<8x1xf32>
    %12 = vector.broadcast %4 : vector<8x1xf32> to vector<8x32xf32>
    %13 = arith.subf %0, %12 : vector<8x32xf32>
    %cst_4 = arith.constant 9.99999974E-6 : f32
    %14 = vector.broadcast %cst_4 : f32 to vector<8x1xf32>
    %15 = arith.addf %11, %14 : vector<8x1xf32>
    %16 = math.rsqrt %15 : vector<8x1xf32>
    %17 = vector.broadcast %16 : vector<8x1xf32> to vector<8x32xf32>
    %18 = arith.mulf %13, %17 : vector<8x32xf32>
    %c0_5 = arith.constant 0 : index
    %c0_6 = arith.constant 0 : index
    %19 = vector.load %arg5[%c0_5, %c0_6] : memref<1x32xf32, #tpu.memory_space<vmem>>, vector<1x32xf32>
    %20 = vector.broadcast %19 : vector<1x32xf32> to vector<8x32xf32>
    %21 = arith.mulf %18, %20 : vector<8x32xf32>
    %c0_7 = arith.constant 0 : index
    %c0_8 = arith.constant 0 : index
    %22 = vector.load %arg6[%c0_7, %c0_8] : memref<1x32xf32, #tpu.memory_space<vmem>>, vector<1x32xf32>
    %23 = vector.broadcast %22 : vector<1x32xf32> to vector<8x32xf32>
    %24 = arith.addf %21, %23 : vector<8x32xf32>
    %c0_9 = arith.constant 0 : index
    %c0_10 = arith.constant 0 : index
    %25 = vector.load %arg9[%c0_9, %c0_10] : memref<32x96xf32, #tpu.memory_space<vmem>>, vector<32x96xf32>
    %cst_11 = arith.constant dense<0.000000e+00> : vector<8x96xf32>
    %26 = tpu.matmul %24, %25, %cst_11 {dimension_numbers = #tpu.dot_dimension_numbers<[1], [0], [0], [1], [0, 0, 1, 1], [], []>} : vector<8x32xf32>, vector<32x96xf32>, vector<8x96xf32> -> vector<8x96xf32>
    %c0_12 = arith.constant 0 : index
    %c0_13 = arith.constant 0 : index
    %27 = vector.load %arg10[%c0_12, %c0_13] : memref<1x96xf32, #tpu.memory_space<vmem>>, vector<1x96xf32>
    %28 = vector.broadcast %27 : vector<1x96xf32> to vector<8x96xf32>
    %29 = arith.addf %26, %28 : vector<8x96xf32>
    %30 = vector.extract_strided_slice %29 {offsets = [0, 0], sizes = [8, 32], strides = [1, 1]} : vector<8x96xf32> to vector<8x32xf32>
    %31 = vector.extract_strided_slice %29 {offsets = [0, 32], sizes = [8, 32], strides = [1, 1]} : vector<8x96xf32> to vector<8x32xf32>
    %32 = vector.extract_strided_slice %29 {offsets = [0, 64], sizes = [8, 32], strides = [1, 1]} : vector<8x96xf32> to vector<8x32xf32>
    %c0_14 = arith.constant 0 : index
    %c0_15 = arith.constant 0 : index
    %33 = vector.load %arg2[%c0_14, %c0_15] : memref<8x32xf32, #tpu.memory_space<vmem>>, vector<8x32xf32>
    %c0_16 = arith.constant 0 : index
    %c0_17 = arith.constant 0 : index
    %34 = vector.load %arg3[%c0_16, %c0_17] : memref<8x32xf32, #tpu.memory_space<vmem>>, vector<8x32xf32>
    %c0_18 = arith.constant 0 : index
    %c0_19 = arith.constant 0 : index
    %35 = vector.load %arg4[%c0_18, %c0_19] : memref<8x32xf32, #tpu.memory_space<vmem>>, vector<8x32xf32>
    %36 = arith.mulf %30, %33 : vector<8x32xf32>
    %37 = vector.extract_strided_slice %30 {offsets = [0, 1], sizes = [8, 31], strides = [1, 1]} : vector<8x32xf32> to vector<8x31xf32>
    %38 = vector.extract_strided_slice %30 {offsets = [0, 0], sizes = [8, 1], strides = [1, 1]} : vector<8x32xf32> to vector<8x1xf32>
    %39 = tpu.concatenate %37, %38 in 1 : vector<8x31xf32>, vector<8x1xf32> -> vector<8x32xf32>
    %40 = arith.mulf %39, %34 : vector<8x32xf32>
    %41 = arith.addf %36, %40 : vector<8x32xf32>
    %42 = vector.extract_strided_slice %30 {offsets = [0, 31], sizes = [8, 1], strides = [1, 1]} : vector<8x32xf32> to vector<8x1xf32>
    %43 = vector.extract_strided_slice %30 {offsets = [0, 0], sizes = [8, 31], strides = [1, 1]} : vector<8x32xf32> to vector<8x31xf32>
    %44 = tpu.concatenate %42, %43 in 1 : vector<8x1xf32>, vector<8x31xf32> -> vector<8x32xf32>
    %45 = arith.mulf %44, %35 : vector<8x32xf32>
    %46 = arith.addf %41, %45 : vector<8x32xf32>
    %47 = arith.mulf %31, %33 : vector<8x32xf32>
    %48 = vector.extract_strided_slice %31 {offsets = [0, 1], sizes = [8, 31], strides = [1, 1]} : vector<8x32xf32> to vector<8x31xf32>
    %49 = vector.extract_strided_slice %31 {offsets = [0, 0], sizes = [8, 1], strides = [1, 1]} : vector<8x32xf32> to vector<8x1xf32>
    %50 = tpu.concatenate %48, %49 in 1 : vector<8x31xf32>, vector<8x1xf32> -> vector<8x32xf32>
    %51 = arith.mulf %50, %34 : vector<8x32xf32>
    %52 = arith.addf %47, %51 : vector<8x32xf32>
    %53 = vector.extract_strided_slice %31 {offsets = [0, 31], sizes = [8, 1], strides = [1, 1]} : vector<8x32xf32> to vector<8x1xf32>
    %54 = vector.extract_strided_slice %31 {offsets = [0, 0], sizes = [8, 31], strides = [1, 1]} : vector<8x32xf32> to vector<8x31xf32>
    %55 = tpu.concatenate %53, %54 in 1 : vector<8x1xf32>, vector<8x31xf32> -> vector<8x32xf32>
    %56 = arith.mulf %55, %35 : vector<8x32xf32>
    %57 = arith.addf %52, %56 : vector<8x32xf32>
    %58 = vector.extract_strided_slice %46 {offsets = [0, 0], sizes = [8, 8], strides = [1, 1]} : vector<8x32xf32> to vector<8x8xf32>
    %59 = vector.extract_strided_slice %46 {offsets = [0, 8], sizes = [8, 8], strides = [1, 1]} : vector<8x32xf32> to vector<8x8xf32>
    %60 = vector.extract_strided_slice %46 {offsets = [0, 16], sizes = [8, 8], strides = [1, 1]} : vector<8x32xf32> to vector<8x8xf32>
    %61 = vector.extract_strided_slice %46 {offsets = [0, 24], sizes = [8, 8], strides = [1, 1]} : vector<8x32xf32> to vector<8x8xf32>
    %62 = vector.shape_cast %58 : vector<8x8xf32> to vector<1x8x8xf32>
    %63 = vector.shape_cast %59 : vector<8x8xf32> to vector<1x8x8xf32>
    %64 = vector.shape_cast %60 : vector<8x8xf32> to vector<1x8x8xf32>
    %65 = vector.shape_cast %61 : vector<8x8xf32> to vector<1x8x8xf32>
    %66 = tpu.concatenate %62, %63, %64, %65 in 0 : vector<1x8x8xf32>, vector<1x8x8xf32>, vector<1x8x8xf32>, vector<1x8x8xf32> -> vector<4x8x8xf32>
    %67 = vector.extract_strided_slice %57 {offsets = [0, 0], sizes = [8, 8], strides = [1, 1]} : vector<8x32xf32> to vector<8x8xf32>
    %68 = vector.extract_strided_slice %57 {offsets = [0, 8], sizes = [8, 8], strides = [1, 1]} : vector<8x32xf32> to vector<8x8xf32>
    %69 = vector.extract_strided_slice %57 {offsets = [0, 16], sizes = [8, 8], strides = [1, 1]} : vector<8x32xf32> to vector<8x8xf32>
    %70 = vector.extract_strided_slice %57 {offsets = [0, 24], sizes = [8, 8], strides = [1, 1]} : vector<8x32xf32> to vector<8x8xf32>
    %71 = vector.shape_cast %67 : vector<8x8xf32> to vector<1x8x8xf32>
    %72 = vector.shape_cast %68 : vector<8x8xf32> to vector<1x8x8xf32>
    %73 = vector.shape_cast %69 : vector<8x8xf32> to vector<1x8x8xf32>
    %74 = vector.shape_cast %70 : vector<8x8xf32> to vector<1x8x8xf32>
    %75 = tpu.concatenate %71, %72, %73, %74 in 0 : vector<1x8x8xf32>, vector<1x8x8xf32>, vector<1x8x8xf32>, vector<1x8x8xf32> -> vector<4x8x8xf32>
    %76 = vector.extract_strided_slice %32 {offsets = [0, 0], sizes = [8, 8], strides = [1, 1]} : vector<8x32xf32> to vector<8x8xf32>
    %77 = vector.extract_strided_slice %32 {offsets = [0, 8], sizes = [8, 8], strides = [1, 1]} : vector<8x32xf32> to vector<8x8xf32>
    %78 = vector.extract_strided_slice %32 {offsets = [0, 16], sizes = [8, 8], strides = [1, 1]} : vector<8x32xf32> to vector<8x8xf32>
    %79 = vector.extract_strided_slice %32 {offsets = [0, 24], sizes = [8, 8], strides = [1, 1]} : vector<8x32xf32> to vector<8x8xf32>
    %80 = vector.shape_cast %76 : vector<8x8xf32> to vector<1x8x8xf32>
    %81 = vector.shape_cast %77 : vector<8x8xf32> to vector<1x8x8xf32>
    %82 = vector.shape_cast %78 : vector<8x8xf32> to vector<1x8x8xf32>
    %83 = vector.shape_cast %79 : vector<8x8xf32> to vector<1x8x8xf32>
    %84 = tpu.concatenate %80, %81, %82, %83 in 0 : vector<1x8x8xf32>, vector<1x8x8xf32>, vector<1x8x8xf32>, vector<1x8x8xf32> -> vector<4x8x8xf32>
    %85 = tpu.iota {dimensions = array<i32: 0>} : vector<8x8xi32>
    %86 = tpu.iota {dimensions = array<i32: 1>} : vector<8x8xi32>
    %87 = arith.cmpi sge, %85, %86 : vector<8x8xi32>
    %88 = vector.shape_cast %87 : vector<8x8xi1> to vector<1x8x8xi1>
    "tpu.trace_start"() <{level = 10 : i32, message = "htd,hsd->hts"}> : () -> ()
    %cst_20 = arith.constant dense<0.000000e+00> : vector<4x8x8xf32>
    %89 = tpu.matmul %66, %75, %cst_20 {dimension_numbers = #tpu.dot_dimension_numbers<[2], [2], [1], [1], [0, 0, 0, 1, 1, 1], [0], [0]>} : vector<4x8x8xf32>, vector<4x8x8xf32>, vector<4x8x8xf32> -> vector<4x8x8xf32>
    "tpu.trace_stop"() : () -> ()
    %cst_21 = arith.constant 0.353553385 : f32
    %90 = vector.broadcast %cst_21 : f32 to vector<4x8x8xf32>
    %91 = arith.mulf %89, %90 : vector<4x8x8xf32>
    %cst_22 = arith.constant -1.000000e+30 : f32
    %92 = vector.shape_cast %88 : vector<1x8x8xi1> to vector<1x8x8xi1>
    %93 = vector.broadcast %92 : vector<1x8x8xi1> to vector<4x8x8xi1>
    %94 = vector.broadcast %cst_22 : f32 to vector<4x8x8xf32>
    %95 = arith.select %93, %91, %94 : vector<4x8x8xi1>, vector<4x8x8xf32>
    %cst_23 = arith.constant dense<0xFF800000> : vector<4x8xf32>
    %96 = vector.multi_reduction <maximumf>, %95, %cst_23 [2] : vector<4x8x8xf32> to vector<4x8xf32>
    %97 = vector.shape_cast %96 : vector<4x8xf32> to vector<4x8x1xf32>
    %98 = vector.broadcast %97 : vector<4x8x1xf32> to vector<4x8x8xf32>
    %99 = arith.subf %95, %98 : vector<4x8x8xf32>
    %100 = math.exp %99 : vector<4x8x8xf32>
    %cst_24 = arith.constant dense<0.000000e+00> : vector<4x8xf32>
    %101 = vector.multi_reduction <add>, %100, %cst_24 [2] : vector<4x8x8xf32> to vector<4x8xf32>
    %102 = vector.shape_cast %101 : vector<4x8xf32> to vector<4x8x1xf32>
    %103 = tpu.reciprocal %102 {approx = true} : vector<4x8x1xf32> -> vector<4x8x1xf32>
    %104 = vector.broadcast %103 : vector<4x8x1xf32> to vector<4x8x8xf32>
    %105 = arith.mulf %100, %104 : vector<4x8x8xf32>
    "tpu.trace_start"() <{level = 10 : i32, message = "hts,hsd->htd"}> : () -> ()
    %cst_25 = arith.constant dense<0.000000e+00> : vector<4x8x8xf32>
    %106 = tpu.matmul %105, %84, %cst_25 {dimension_numbers = #tpu.dot_dimension_numbers<[2], [1], [1], [2], [0, 0, 0, 1, 1, 2], [0], [0]>} : vector<4x8x8xf32>, vector<4x8x8xf32>, vector<4x8x8xf32> -> vector<4x8x8xf32>
    "tpu.trace_stop"() : () -> ()
    %107 = vector.extract_strided_slice %106 {offsets = [0, 0, 0], sizes = [1, 8, 8], strides = [1, 1, 1]} : vector<4x8x8xf32> to vector<1x8x8xf32>
    %108 = vector.shape_cast %107 : vector<1x8x8xf32> to vector<8x8xf32>
    %109 = vector.extract_strided_slice %106 {offsets = [1, 0, 0], sizes = [1, 8, 8], strides = [1, 1, 1]} : vector<4x8x8xf32> to vector<1x8x8xf32>
    %110 = vector.shape_cast %109 : vector<1x8x8xf32> to vector<8x8xf32>
    %111 = vector.extract_strided_slice %106 {offsets = [2, 0, 0], sizes = [1, 8, 8], strides = [1, 1, 1]} : vector<4x8x8xf32> to vector<1x8x8xf32>
    %112 = vector.shape_cast %111 : vector<1x8x8xf32> to vector<8x8xf32>
    %113 = vector.extract_strided_slice %106 {offsets = [3, 0, 0], sizes = [1, 8, 8], strides = [1, 1, 1]} : vector<4x8x8xf32> to vector<1x8x8xf32>
    %114 = vector.shape_cast %113 : vector<1x8x8xf32> to vector<8x8xf32>
    %115 = tpu.concatenate %108, %110, %112, %114 in 1 : vector<8x8xf32>, vector<8x8xf32>, vector<8x8xf32>, vector<8x8xf32> -> vector<8x32xf32>
    %c0_26 = arith.constant 0 : index
    %c0_27 = arith.constant 0 : index
    %116 = vector.load %arg11[%c0_26, %c0_27] : memref<32x32xf32, #tpu.memory_space<vmem>>, vector<32x32xf32>
    %cst_28 = arith.constant dense<0.000000e+00> : vector<8x32xf32>
    %117 = tpu.matmul %115, %116, %cst_28 {dimension_numbers = #tpu.dot_dimension_numbers<[1], [0], [0], [1], [0, 0, 1, 1], [], []>} : vector<8x32xf32>, vector<32x32xf32>, vector<8x32xf32> -> vector<8x32xf32>
    %c0_29 = arith.constant 0 : index
    %c0_30 = arith.constant 0 : index
    %118 = vector.load %arg12[%c0_29, %c0_30] : memref<1x32xf32, #tpu.memory_space<vmem>>, vector<1x32xf32>
    %119 = vector.broadcast %118 : vector<1x32xf32> to vector<8x32xf32>
    %120 = arith.addf %117, %119 : vector<8x32xf32>
    %cst_31 = arith.constant dense<0.000000e+00> : vector<8xf32>
    %121 = vector.multi_reduction <add>, %0, %cst_31 [1] : vector<8x32xf32> to vector<8xf32>
    %122 = vector.shape_cast %121 : vector<8xf32> to vector<8x1xf32>
    %cst_32 = arith.constant 3.200000e+01 : f32
    %123 = vector.broadcast %cst_32 : f32 to vector<8x1xf32>
    %124 = arith.divf %122, %123 : vector<8x1xf32>
    %125 = vector.broadcast %124 : vector<8x1xf32> to vector<8x32xf32>
    %126 = arith.subf %0, %125 : vector<8x32xf32>
    %127 = arith.mulf %126, %126 : vector<8x32xf32>
    %cst_33 = arith.constant dense<0.000000e+00> : vector<8xf32>
    %128 = vector.multi_reduction <add>, %127, %cst_33 [1] : vector<8x32xf32> to vector<8xf32>
    %129 = vector.shape_cast %128 : vector<8xf32> to vector<8x1xf32>
    %cst_34 = arith.constant 3.200000e+01 : f32
    %130 = vector.broadcast %cst_34 : f32 to vector<8x1xf32>
    %131 = arith.divf %129, %130 : vector<8x1xf32>
    %132 = vector.broadcast %124 : vector<8x1xf32> to vector<8x32xf32>
    %133 = arith.subf %0, %132 : vector<8x32xf32>
    %cst_35 = arith.constant 9.99999974E-6 : f32
    %134 = vector.broadcast %cst_35 : f32 to vector<8x1xf32>
    %135 = arith.addf %131, %134 : vector<8x1xf32>
    %136 = math.rsqrt %135 : vector<8x1xf32>
    %137 = vector.broadcast %136 : vector<8x1xf32> to vector<8x32xf32>
    %138 = arith.mulf %133, %137 : vector<8x32xf32>
    %c0_36 = arith.constant 0 : index
    %c0_37 = arith.constant 0 : index
    %139 = vector.load %arg7[%c0_36, %c0_37] : memref<1x32xf32, #tpu.memory_space<vmem>>, vector<1x32xf32>
    %140 = vector.broadcast %139 : vector<1x32xf32> to vector<8x32xf32>
    %141 = arith.mulf %138, %140 : vector<8x32xf32>
    %c0_38 = arith.constant 0 : index
    %c0_39 = arith.constant 0 : index
    %142 = vector.load %arg8[%c0_38, %c0_39] : memref<1x32xf32, #tpu.memory_space<vmem>>, vector<1x32xf32>
    %143 = vector.broadcast %142 : vector<1x32xf32> to vector<8x32xf32>
    %144 = arith.addf %141, %143 : vector<8x32xf32>
    %c0_40 = arith.constant 0 : index
    %c0_41 = arith.constant 0 : index
    %145 = vector.load %arg13[%c0_40, %c0_41] : memref<32x128xf32, #tpu.memory_space<vmem>>, vector<32x128xf32>
    %cst_42 = arith.constant dense<0.000000e+00> : vector<8x128xf32>
    %146 = tpu.matmul %144, %145, %cst_42 {dimension_numbers = #tpu.dot_dimension_numbers<[1], [0], [0], [1], [0, 0, 1, 1], [], []>} : vector<8x32xf32>, vector<32x128xf32>, vector<8x128xf32> -> vector<8x128xf32>
    %c0_43 = arith.constant 0 : index
    %c0_44 = arith.constant 0 : index
    %147 = vector.load %arg14[%c0_43, %c0_44] : memref<1x128xf32, #tpu.memory_space<vmem>>, vector<1x128xf32>
    %148 = vector.broadcast %147 : vector<1x128xf32> to vector<8x128xf32>
    %149 = arith.addf %146, %148 : vector<8x128xf32>
    %cst_45 = arith.constant 5.000000e-01 : f32
    %150 = vector.broadcast %cst_45 : f32 to vector<8x128xf32>
    %151 = arith.mulf %150, %149 : vector<8x128xf32>
    %cst_46 = arith.constant 1.41421354 : f32
    %152 = vector.broadcast %cst_46 : f32 to vector<8x128xf32>
    %153 = arith.divf %149, %152 : vector<8x128xf32>
    %cst_47 = arith.constant 0.000000e+00 : f32
    %154 = vector.broadcast %cst_47 : f32 to vector<8x128xf32>
    %155 = arith.cmpf oge, %153, %154 : vector<8x128xf32>
    %cst_48 = arith.constant 1.000000e+00 : f32
    %cst_49 = arith.constant -1.000000e+00 : f32
    %156 = vector.broadcast %cst_48 : f32 to vector<8x128xf32>
    %157 = vector.broadcast %cst_49 : f32 to vector<8x128xf32>
    %158 = arith.select %155, %156, %157 : vector<8x128xi1>, vector<8x128xf32>
    %159 = math.absf %153 : vector<8x128xf32>
    %cst_50 = arith.constant 0.327591091 : f32
    %160 = vector.broadcast %cst_50 : f32 to vector<8x128xf32>
    %161 = arith.mulf %160, %159 : vector<8x128xf32>
    %cst_51 = arith.constant 1.000000e+00 : f32
    %162 = vector.broadcast %cst_51 : f32 to vector<8x128xf32>
    %163 = arith.addf %162, %161 : vector<8x128xf32>
    %cst_52 = arith.constant 1.000000e+00 : f32
    %164 = vector.broadcast %cst_52 : f32 to vector<8x128xf32>
    %165 = arith.divf %164, %163 : vector<8x128xf32>
    %cst_53 = arith.constant 1.06140542 : f32
    %166 = vector.broadcast %cst_53 : f32 to vector<8x128xf32>
    %167 = arith.mulf %166, %165 : vector<8x128xf32>
    %cst_54 = arith.constant -1.45315206 : f32
    %168 = vector.broadcast %cst_54 : f32 to vector<8x128xf32>
    %169 = arith.addf %167, %168 : vector<8x128xf32>
    %170 = arith.mulf %169, %165 : vector<8x128xf32>
    %cst_55 = arith.constant 1.42141378 : f32
    %171 = vector.broadcast %cst_55 : f32 to vector<8x128xf32>
    %172 = arith.addf %170, %171 : vector<8x128xf32>
    %173 = arith.mulf %172, %165 : vector<8x128xf32>
    %cst_56 = arith.constant -0.284496725 : f32
    %174 = vector.broadcast %cst_56 : f32 to vector<8x128xf32>
    %175 = arith.addf %173, %174 : vector<8x128xf32>
    %176 = arith.mulf %175, %165 : vector<8x128xf32>
    %cst_57 = arith.constant 0.254829586 : f32
    %177 = vector.broadcast %cst_57 : f32 to vector<8x128xf32>
    %178 = arith.addf %176, %177 : vector<8x128xf32>
    %179 = arith.mulf %178, %165 : vector<8x128xf32>
    %cst_58 = arith.constant 0.000000e+00 : f32
    %180 = vector.broadcast %cst_58 : f32 to vector<8x128xf32>
    %181 = arith.subf %180, %159 : vector<8x128xf32>
    %182 = arith.mulf %181, %159 : vector<8x128xf32>
    %183 = math.exp %182 : vector<8x128xf32>
    %184 = arith.mulf %179, %183 : vector<8x128xf32>
    %cst_59 = arith.constant 1.000000e+00 : f32
    %185 = vector.broadcast %cst_59 : f32 to vector<8x128xf32>
    %186 = arith.subf %185, %184 : vector<8x128xf32>
    %187 = arith.mulf %158, %186 : vector<8x128xf32>
    %cst_60 = arith.constant 1.000000e+00 : f32
    %188 = vector.broadcast %cst_60 : f32 to vector<8x128xf32>
    %189 = arith.addf %188, %187 : vector<8x128xf32>
    %190 = arith.mulf %151, %189 : vector<8x128xf32>
    %c0_61 = arith.constant 0 : index
    %c0_62 = arith.constant 0 : index
    %191 = vector.load %arg15[%c0_61, %c0_62] : memref<128x32xf32, #tpu.memory_space<vmem>>, vector<128x32xf32>
    %cst_63 = arith.constant dense<0.000000e+00> : vector<8x32xf32>
    %192 = tpu.matmul %190, %191, %cst_63 {dimension_numbers = #tpu.dot_dimension_numbers<[1], [0], [0], [1], [0, 0, 1, 1], [], []>} : vector<8x128xf32>, vector<128x32xf32>, vector<8x32xf32> -> vector<8x32xf32>
    %c0_64 = arith.constant 0 : index
    %c0_65 = arith.constant 0 : index
    %193 = vector.load %arg16[%c0_64, %c0_65] : memref<1x32xf32, #tpu.memory_space<vmem>>, vector<1x32xf32>
    %194 = vector.broadcast %193 : vector<1x32xf32> to vector<8x32xf32>
    %195 = arith.addf %192, %194 : vector<8x32xf32>
    %196 = arith.addf %195, %120 : vector<8x32xf32>
    %197 = arith.addf %196, %0 : vector<8x32xf32>
    %c0_66 = arith.constant 0 : index
    %c0_67 = arith.constant 0 : index
    %198 = vector.load %arg17[%c0_66, %c0_67] : memref<8x32xf32, #tpu.memory_space<vmem>>, vector<8x32xf32>
    tpu.vector_store %arg17[%c0_66, %c0_67], %197 {strides = array<i32>} : memref<8x32xf32, #tpu.memory_space<vmem>>, vector<8x32xf32>,
    return
  }
  func.func @transform_0(%arg0: i32) -> (i32, i32) {
    %c0_i32 = arith.constant 0 : i32
    %c0_i32_0 = arith.constant 0 : i32
    %c0_i32_1 = arith.constant 0 : i32
    return %c0_i32, %c0_i32_0 : i32, i32
  }
  func.func @transform_1(%arg0: i32) -> (i32, i32) {
    %c0_i32 = arith.constant 0 : i32
    %c0_i32_0 = arith.constant 0 : i32
    %c0_i32_1 = arith.constant 0 : i32
    return %c0_i32, %c0_i32_0 : i32, i32
  }
  func.func @transform_2(%arg0: i32) -> (i32, i32) {
    %c0_i32 = arith.constant 0 : i32
    %c0_i32_0 = arith.constant 0 : i32
    %c0_i32_1 = arith.constant 0 : i32
    return %c0_i32, %c0_i32_0 : i32, i32
  }
  func.func @transform_3(%arg0: i32) -> (i32, i32) {
    %c0_i32 = arith.constant 0 : i32
    %c0_i32_0 = arith.constant 0 : i32
    %c0_i32_1 = arith.constant 0 : i32
    return %c0_i32, %c0_i32_0 : i32, i32
  }
  func.func @transform_4(%arg0: i32) -> (i32, i32) {
    %c0_i32 = arith.constant 0 : i32
    %c0_i32_0 = arith.constant 0 : i32
    %c0_i32_1 = arith.constant 0 : i32
    return %c0_i32, %c0_i32_0 : i32, i32
  }
  func.func @transform_5(%arg0: i32) -> (i32, i32) {
    %c0_i32 = arith.constant 0 : i32
    %c0_i32_0 = arith.constant 0 : i32
    %c0_i32_1 = arith.constant 0 : i32
    return %c0_i32, %c0_i32_0 : i32, i32
  }
  func.func @transform_6(%arg0: i32) -> (i32, i32) {
    %c0_i32 = arith.constant 0 : i32
    %c0_i32_0 = arith.constant 0 : i32
    %c0_i32_1 = arith.constant 0 : i32
    return %c0_i32, %c0_i32_0 : i32, i32
  }
  func.func @transform_7(%arg0: i32) -> (i32, i32) {
    %c0_i32 = arith.constant 0 : i32
    %c0_i32_0 = arith.constant 0 : i32
    %c0_i32_1 = arith.constant 0 : i32
    return %c0_i32, %c0_i32_0 : i32, i32
  }
  func.func @transform_8(%arg0: i32) -> (i32, i32) {
    %c0_i32 = arith.constant 0 : i32
    %c0_i32_0 = arith.constant 0 : i32
    %c0_i32_1 = arith.constant 0 : i32
    return %c0_i32, %c0_i32_0 : i32, i32
  }
  func.func @transform_9(%arg0: i32) -> (i32, i32) {
    %c0_i32 = arith.constant 0 : i32
    %c0_i32_0 = arith.constant 0 : i32
    %c0_i32_1 = arith.constant 0 : i32
    return %c0_i32, %c0_i32_0 : i32, i32
  }
  func.func @transform_10(%arg0: i32) -> (i32, i32) {
    %c0_i32 = arith.constant 0 : i32
    %c0_i32_0 = arith.constant 0 : i32
    %c0_i32_1 = arith.constant 0 : i32
    return %c0_i32, %c0_i32_0 : i32, i32
  }
  func.func @transform_11(%arg0: i32) -> (i32, i32) {
    %c0_i32 = arith.constant 0 : i32
    %c0_i32_0 = arith.constant 0 : i32
    %c0_i32_1 = arith.constant 0 : i32
    return %c0_i32, %c0_i32_0 : i32, i32
  }
  func.func @transform_12(%arg0: i32) -> (i32, i32) {
    %c0_i32 = arith.constant 0 : i32
    %c0_i32_0 = arith.constant 0 : i32
    %c0_i32_1 = arith.constant 0 : i32
    return %c0_i32, %c0_i32_0 : i32, i32
  }
  func.func @transform_13(%arg0: i32) -> (i32, i32) {
    %c0_i32 = arith.constant 0 : i32
    %c0_i32_0 = arith.constant 0 : i32
    %c0_i32_1 = arith.constant 0 : i32
    return %c0_i32, %c0_i32_0 : i32, i32
  }
  func.func @transform_14(%arg0: i32) -> (i32, i32) {
    %c0_i32 = arith.constant 0 : i32
    %c0_i32_0 = arith.constant 0 : i32
    %c0_i32_1 = arith.constant 0 : i32
    return %c0_i32, %c0_i32_0 : i32, i32
  }
  func.func @transform_15(%arg0: i32) -> (i32, i32) {
    %c0_i32 = arith.constant 0 : i32
    %c0_i32_0 = arith.constant 0 : i32
    %c0_i32_1 = arith.constant 0 : i32
    return %c0_i32, %c0_i32_0 : i32, i32
  }
  func.func @transform_16(%arg0: i32) -> (i32, i32) {
    %c0_i32 = arith.constant 0 : i32
    %c0_i32_0 = arith.constant 0 : i32
    %c0_i32_1 = arith.constant 0 : i32
    return %c0_i32, %c0_i32_0 : i32, i32
  }
}

</mosaic_0001>

<llo_original>
// kernel: tile.29
$region0: #{tile.29}
  %s0 = inlined_call_operand.vmem [shape: f32[8,4,8], index: 0, kind: input, shape index: {}]
  %s1 = inlined_call_operand.vmem [shape: f32[8,32], index: 1, kind: output, shape index: {}]
  $region1: #{tile.29} parent=0
    #allocation0 [shape = 'u8[32768]{0}', space=vmem, size = 0x8000, scoped, tag = 'scoped mem for input reshape']
    %s3 = sshllo.u32 0, 4
    %s4 = smul.addr 4, 7
    %s5 = scalar_lea.vmem %s0, %s4
    %v6 = vld [vmem:[%s5] sm:%s3]
    %s7 = scalar_lea.vmem [#allocation0], 56
    %8 = vst [vmem:[%s7] sm:%s3] %v6
    %s9 = smul.addr 4, 6
    %s10 = scalar_lea.vmem %s0, %s9
    %v11 = vld [vmem:[%s10] sm:%s3]
    %s12 = scalar_lea.vmem [#allocation0], 48
    %13 = vst [vmem:[%s12] sm:%s3] %v11
    %s14 = smul.addr 4, 5
    %s15 = scalar_lea.vmem %s0, %s14
    %v16 = vld [vmem:[%s15] sm:%s3]
    %s17 = scalar_lea.vmem [#allocation0], 40
    %18 = vst [vmem:[%s17] sm:%s3] %v16
    %s19 = smul.addr 4, 4
    %s20 = scalar_lea.vmem %s0, %s19
    %v21 = vld [vmem:[%s20] sm:%s3]
    %s22 = scalar_lea.vmem [#allocation0], 32
    %23 = vst [vmem:[%s22] sm:%s3] %v21
    %s24 = smul.addr 4, 3
    %s25 = scalar_lea.vmem %s0, %s24
    %v26 = vld [vmem:[%s25] sm:%s3]
    %s27 = scalar_lea.vmem [#allocation0], 24
    %28 = vst [vmem:[%s27] sm:%s3] %v26
    %s29 = smul.addr 4, 2
    %s30 = scalar_lea.vmem %s0, %s29
    %v31 = vld [vmem:[%s30] sm:%s3]
    %s32 = scalar_lea.vmem [#allocation0], 16
    %33 = vst [vmem:[%s32] sm:%s3] %v31
    %s34 = scalar_lea.vmem %s0, 4
    %v35 = vld [vmem:[%s34] sm:%s3]
    %s36 = scalar_lea.vmem [#allocation0], 8
    %37 = vst [vmem:[%s36] sm:%s3] %v35
    %v38 = vld [vmem:[%s0] sm:%s3]
    %39 = vst [vmem:[#allocation0] sm:%s3] %v38
    %v40 = vld [vmem:[#allocation0] ss:$8 sm:$0xf]
    %v41 = vld [vmem:[#allocation0] ss:$8 sm:$0xf0]
    %vm42 = vcmask 1047556
    %v43 = vsel %vm42, %v41, %v40
    %vm44 = vcmask 64512
    %45 = vst.msk [vmem:[%s1] sm:$0xff] %vm44, %v43
    %s46 = scalar_lea.vmem [#allocation0], 3
    %v47 = vld [vmem:[%s46] ss:$8 sm:$0xf]
    %s48 = scalar_lea.vmem [#allocation0], 3
    %v49 = vld [vmem:[%s48] ss:$8 sm:$0xf0]
    %vm50 = vcmask 1047556
    %v51 = vsel %vm50, %v49, %v47
    %52 = vrot.lane.b32.xlu0 %v51, 24
    %v53 = vpop.permute.xlu0 %52
    %vm54 = vcmask 261312
    %55 = vst.msk [vmem:[%s1] sm:$0xff] %vm54, %v53
    %s56 = scalar_lea.vmem [#allocation0], 2
    %v57 = vld [vmem:[%s56] ss:$8 sm:$0xf]
    %s58 = scalar_lea.vmem [#allocation0], 2
    %v59 = vld [vmem:[%s58] ss:$8 sm:$0xf0]
    %vm60 = vcmask 1047556
    %v61 = vsel %vm60, %v59, %v57
    %62 = vrot.lane.b32.xlu0 %v61, 16
    %v63 = vpop.permute.xlu0 %62
    %vm64 = vcmask 195712
    %65 = vst.msk [vmem:[%s1] sm:$0xff] %vm64, %v63
    %s66 = scalar_lea.vmem [#allocation0], 1
    %v67 = vld [vmem:[%s66] ss:$8 sm:$0xf]
    %s68 = scalar_lea.vmem [#allocation0], 1
    %v69 = vld [vmem:[%s68] ss:$8 sm:$0xf0]
    %vm70 = vcmask 1047556
    %v71 = vsel %vm70, %v69, %v67
    %72 = vrot.lane.b32.xlu0 %v71, 8
    %v73 = vpop.permute.xlu0 %72
    %vm74 = vcmask 130112
    %75 = vst.msk [vmem:[%s1] sm:$0xff] %vm74, %v73

// kernel: gpt_neox_layer.1
$region0: #{gpt_neox_layer.1}
  #allocation0 [shape = 'u32[]', space=smem, size = 0x4, offset = 0x4, fixed_abs, tag = 'smem constant byte address 0x4 - core index']
  #allocation1 [shape = 'u32[144,128]{1,0:T(1,128)}', space=vmem, size = 0x12000, scoped, tag = 'internal scratch']
  %s0 = inlined_call_operand.vmem [shape: f32[8,32], index: 0, kind: input, shape index: {}]
  %s1 = inlined_call_operand.vmem [shape: f32[8,32], index: 1, kind: input, shape index: {}]
  %s2 = inlined_call_operand.vmem [shape: f32[8,32], index: 2, kind: input, shape index: {}]
  %s3 = inlined_call_operand.vmem [shape: f32[8,32], index: 3, kind: input, shape index: {}]
  %s4 = inlined_call_operand.vmem [shape: f32[1,32], index: 4, kind: input, shape index: {}]
  %s5 = inlined_call_operand.vmem [shape: f32[1,32], index: 5, kind: input, shape index: {}]
  %s6 = inlined_call_operand.vmem [shape: f32[1,32], index: 6, kind: input, shape index: {}]
  %s7 = inlined_call_operand.vmem [shape: f32[1,32], index: 7, kind: input, shape index: {}]
  %s8 = inlined_call_operand.vmem [shape: f32[32,96], index: 8, kind: input, shape index: {}]
  %s9 = inlined_call_operand.vmem [shape: f32[1,96], index: 9, kind: input, shape index: {}]
  %s10 = inlined_call_operand.vmem [shape: f32[32,32], index: 10, kind: input, shape index: {}]
  %s11 = inlined_call_operand.vmem [shape: f32[1,32], index: 11, kind: input, shape index: {}]
  %s12 = inlined_call_operand.vmem [shape: f32[32,128], index: 12, kind: input, shape index: {}]
  %s13 = inlined_call_operand.vmem [shape: f32[1,128], index: 13, kind: input, shape index: {}]
  %s14 = inlined_call_operand.vmem [shape: f32[128,32], index: 14, kind: input, shape index: {}]
  %s15 = inlined_call_operand.vmem [shape: f32[1,32], index: 15, kind: input, shape index: {}]
  %s16 = inlined_call_operand.hbm [shape: f32[8,32], index: 16, kind: output, shape index: {}]
  %s17 = sld [smem:[#allocation0]]
  $region74: #{gpt_neox_layer.1} parent=0
    _
  %s19 = ssub.s32 1, %s17
  %s20 = scalar_select 0, %s19, %s17
  $region1: #{gpt_neox_layer.1} parent=0
    #allocation2 [shape = 'u8[4096]{0}', space=vmem, size = 0x1000, scoped, tag = 'output window, operand 0, single buffered']
    #allocation3 [shape = 's32[1]{0}', space=sflag, size = 0x4, scoped, tag = 'scoped memory for gpt_neox_layer.1']
    %21 = vsyncpa [#allocation3], 0
    // Predicated region
    $region2: #{gpt_neox_layer.1} parent=1 // pred_check
      _
    $region3: #{gpt_neox_layer.1} parent=1 // pred_check_branch
      %23 = sbr.rel (0) target = $region5
    $region4: #{gpt_neox_layer.1} parent=1 // pred_region
      _
    $region5: #{gpt_neox_layer.1} parent=1 // pred_fallthru
      _
    // Predicated region
    $region6: #{gpt_neox_layer.1} parent=1 // pred_check
      _
    $region7: #{gpt_neox_layer.1} parent=1 // pred_check_branch
      %25 = sbr.rel (0) target = $region9
    $region8: #{gpt_neox_layer.1} parent=1 // pred_region
      _
    $region9: #{gpt_neox_layer.1} parent=1 // pred_fallthru
      _
    // Predicated region
    $region10: #{gpt_neox_layer.1} parent=1 // pred_check
      _
    $region11: #{gpt_neox_layer.1} parent=1 // pred_check_branch
      %27 = sbr.rel (0) target = $region13
    $region12: #{gpt_neox_layer.1} parent=1 // pred_region
      _
    $region13: #{gpt_neox_layer.1} parent=1 // pred_fallthru
      _
    // Predicated region
    $region14: #{gpt_neox_layer.1} parent=1 // pred_check
      _
    $region15: #{gpt_neox_layer.1} parent=1 // pred_check_branch
      %29 = sbr.rel (0) target = $region17
    $region16: #{gpt_neox_layer.1} parent=1 // pred_region
      _
    $region17: #{gpt_neox_layer.1} parent=1 // pred_fallthru
      _
    // Predicated region
    $region18: #{gpt_neox_layer.1} parent=1 // pred_check
      _
    $region19: #{gpt_neox_layer.1} parent=1 // pred_check_branch
      %31 = sbr.rel (0) target = $region21
    $region20: #{gpt_neox_layer.1} parent=1 // pred_region
      _
    $region21: #{gpt_neox_layer.1} parent=1 // pred_fallthru
      _
    // Predicated region
    $region22: #{gpt_neox_layer.1} parent=1 // pred_check
      _
    $region23: #{gpt_neox_layer.1} parent=1 // pred_check_branch
      %33 = sbr.rel (0) target = $region25
    $region24: #{gpt_neox_layer.1} parent=1 // pred_region
      _
    $region25: #{gpt_neox_layer.1} parent=1 // pred_fallthru
      _
    // Predicated region
    $region26: #{gpt_neox_layer.1} parent=1 // pred_check
      _
    $region27: #{gpt_neox_layer.1} parent=1 // pred_check_branch
      %35 = sbr.rel (0) target = $region29
    $region28: #{gpt_neox_layer.1} parent=1 // pred_region
      _
    $region29: #{gpt_neox_layer.1} parent=1 // pred_fallthru
      _
    // Predicated region
    $region30: #{gpt_neox_layer.1} parent=1 // pred_check
      _
    $region31: #{gpt_neox_layer.1} parent=1 // pred_check_branch
      %37 = sbr.rel (0) target = $region33
    $region32: #{gpt_neox_layer.1} parent=1 // pred_region
      _
    $region33: #{gpt_neox_layer.1} parent=1 // pred_fallthru
      _
    // Predicated region
    $region34: #{gpt_neox_layer.1} parent=1 // pred_check
      _
    $region35: #{gpt_neox_layer.1} parent=1 // pred_check_branch
      %39 = sbr.rel (0) target = $region37
    $region36: #{gpt_neox_layer.1} parent=1 // pred_region
      _
    $region37: #{gpt_neox_layer.1} parent=1 // pred_fallthru
      _
    // Predicated region
    $region38: #{gpt_neox_layer.1} parent=1 // pred_check
      _
    $region39: #{gpt_neox_layer.1} parent=1 // pred_check_branch
      %41 = sbr.rel (0) target = $region41
    $region40: #{gpt_neox_layer.1} parent=1 // pred_region
      _
    $region41: #{gpt_neox_layer.1} parent=1 // pred_fallthru
      _
    // Predicated region
    $region42: #{gpt_neox_layer.1} parent=1 // pred_check
      _
    $region43: #{gpt_neox_layer.1} parent=1 // pred_check_branch
      %43 = sbr.rel (0) target = $region45
    $region44: #{gpt_neox_layer.1} parent=1 // pred_region
      _
    $region45: #{gpt_neox_layer.1} parent=1 // pred_fallthru
      _
    // Predicated region
    $region46: #{gpt_neox_layer.1} parent=1 // pred_check
      _
    $region47: #{gpt_neox_layer.1} parent=1 // pred_check_branch
      %45 = sbr.rel (0) target = $region49
    $region48: #{gpt_neox_layer.1} parent=1 // pred_region
      _
    $region49: #{gpt_neox_layer.1} parent=1 // pred_fallthru
      _
    // Predicated region
    $region50: #{gpt_neox_layer.1} parent=1 // pred_check
      _
    $region51: #{gpt_neox_layer.1} parent=1 // pred_check_branch
      %47 = sbr.rel (0) target = $region53
    $region52: #{gpt_neox_layer.1} parent=1 // pred_region
      _
    $region53: #{gpt_neox_layer.1} parent=1 // pred_fallthru
      _
    // Predicated region
    $region54: #{gpt_neox_layer.1} parent=1 // pred_check
      _
    $region55: #{gpt_neox_layer.1} parent=1 // pred_check_branch
      %49 = sbr.rel (0) target = $region57
    $region56: #{gpt_neox_layer.1} parent=1 // pred_region
      _
    $region57: #{gpt_neox_layer.1} parent=1 // pred_fallthru
      _
    // Predicated region
    $region58: #{gpt_neox_layer.1} parent=1 // pred_check
      _
    $region59: #{gpt_neox_layer.1} parent=1 // pred_check_branch
      %51 = sbr.rel (0) target = $region61
    $region60: #{gpt_neox_layer.1} parent=1 // pred_region
      _
    $region61: #{gpt_neox_layer.1} parent=1 // pred_fallthru
      _
    // Predicated region
    $region62: #{gpt_neox_layer.1} parent=1 // pred_check
      _
    $region63: #{gpt_neox_layer.1} parent=1 // pred_check_branch
      %53 = sbr.rel (0) target = $region65
    $region64: #{gpt_neox_layer.1} parent=1 // pred_region
      _
    $region65: #{gpt_neox_layer.1} parent=1 // pred_fallthru
      _
    %v54 = vld [vmem:[%s0] sm:$0xff]
    %vm55 = vcmask 261120
    %v56 = vsel %vm55, %v54, 0.0
    %57 = vadd.xlane.f32.xlu0 %v56
    %v58 = vpop.xlane.xlu0 %57
    %v59 = vrcp.pop 32.0
    %v60 = vmul.f32 %v58, %v59
    %v61 = vsub.f32 %v54, %v60
    %v62 = vmul.f32 %v61, %v61
    %v63 = vsel %vm55, %v62, 0.0
    %64 = vadd.xlane.f32.xlu0 %v63
    %v65 = vpop.xlane.xlu0 %64
    %v66 = vmul.f32 %v65, %v59
    %v67 = vadd.f32 %v66, 1e-05
    %v68 = vrsqrt.pop %v67
    %v69 = vmul.f32 %v61, %v68
    %v70 = vld [vmem:[%s4] sm:$0x1]
    %v72 = vlaneseq
    %v73 = vshrl.u32 %v72, 7
    %v74 = vsub.s32 0, %v73
    %v75 = vrot.slane %v70, %v74
    %v77 = vmul.f32 %v69, %v75
    %v78 = vld [vmem:[%s5] sm:$0x1]
    %v80 = vlaneseq
    %v81 = vshrl.u32 %v80, 7
    %v82 = vsub.s32 0, %v81
    %v83 = vrot.slane %v78, %v82
    %v85 = vadd.f32 %v77, %v83
    %v86 = vld [vmem:[%s8] sm:$0xff]
    %v87 = vld [vmem:[%s8 + $0x8] sm:$0xff]
    %v88 = vld [vmem:[%s8 + $0x10] sm:$0xff]
    %v89 = vld [vmem:[%s8 + $0x18] sm:$0xff]
    %v90 = vld [vmem:[%s9] sm:$0x1]
    %v92 = vlaneseq
    %v93 = vshrl.u32 %v92, 7
    %v94 = vsub.s32 0, %v93
    %v95 = vrot.slane %v90, %v94
    %v98 = vsel %vm55, %v85, 0
    %100 = vmatprep.subr.mxu0 0.0
    %101 = vmatpush1.msra.mxu0 %v86
    %102 = vmatprep.subr.mxu0 0.0
    %103 = vmatpush1.msra.mxu0 %v87
    %104 = vmatprep.subr.mxu0 0.0
    %105 = vmatpush1.msra.mxu0 %v88
    %106 = vmatprep.subr.mxu0 0.0
    %107 = vmatpush1.msra.mxu0 %v89
    %108 = vmatprep.subr.mxu0 0.0
    %109 = vmatpush1.msra.mxu0 0.0
    %110 = vmatprep.subr.mxu0 0.0
    %111 = vmatpush1.msra.mxu0 0.0
    %112 = vmatprep.subr.mxu0 0.0
    %113 = vmatpush1.msra.mxu0 0.0
    %114 = vmatprep.subr.mxu0 0.0
    %115 = vmatpush1.msra.mxu0 0.0
    %116 = vmatprep.subr.mxu0 0.0
    %117 = vmatpush1.msra.mxu0 0.0
    %118 = vmatprep.subr.mxu0 0.0
    %119 = vmatpush1.msra.mxu0 0.0
    %120 = vmatprep.subr.mxu0 0.0
    %121 = vmatpush1.msra.mxu0 0.0
    %122 = vmatprep.subr.mxu0 0.0
    %123 = vmatpush1.msra.mxu0 0.0
    %124 = vmatprep.subr.mxu0 0.0
    %125 = vmatpush1.msra.mxu0 0.0
    %126 = vmatprep.subr.mxu0 0.0
    %127 = vmatpush1.msra.mxu0 0.0
    %128 = vmatprep.subr.mxu0 0.0
    %129 = vmatpush1.msra.mxu0 0.0
    %130 = vmatprep.subr.mxu0 0.0
    %131 = vmatpush1.msra.mxu0 0.0
    %132 = vmatprep.subr.mxu0 0.0
    %133 = vmatpush1.msra.mxu0 0.0
    %134 = vmatprep.subr.mxu0 0.0
    %135 = vmatpush1.msra.mxu0 0.0
    %136 = vmatprep.subr.mxu0 0.0
    %137 = vmatpush1.msra.mxu0 0.0
    %138 = vmatprep.subr.mxu0 0.0
    %139 = vmatpush1.msra.mxu0 0.0
    %140 = vmatprep.subr.mxu0 0.0
    %141 = vmatpush1.msra.mxu0 0.0
    %142 = vmatprep.subr.mxu0 0.0
    %143 = vmatpush1.msra.mxu0 0.0
    %144 = vmatprep.subr.mxu0 0.0
    %145 = vmatpush1.msra.mxu0 0.0
    %146 = vmatprep.subr.mxu0 0.0
    %147 = vmatpush1.msra.mxu0 0.0
    %148 = vmatprep.subr.mxu0 0.0
    %149 = vmatpush1.msra.mxu0 0.0
    %150 = vmatprep.subr.mxu0 0.0
    %151 = vmatpush1.msra.mxu0 0.0
    %152 = vmatprep.subr.mxu0 0.0
    %153 = vmatpush1.msra.mxu0 0.0
    %154 = vmatprep.subr.mxu0 0.0
    %155 = vmatpush1.msra.mxu0 0.0
    %156 = vmatprep.subr.mxu0 0.0
    %157 = vmatpush1.msra.mxu0 0.0
    %158 = vmatprep.subr.mxu0 0.0
    %159 = vmatpush1.msra.mxu0 0.0
    %160 = vmatprep.subr.mxu0 0.0
    %161 = vmatpush1.msra.mxu0 0.0
    %162 = vmatprep.subr.mxu0 0.0
    %163 = vmatpush1.msra.mxu0 0.0
    %164 = vmatprep.mubr.f32.mxu0 0.0
    %165 = vmatmul.mubr.f32.gmra.mrb[0].mxu0 %v98
    %v166 = vpop.f32.mrb[0].mxu0
    %v167 = vadd.f32 %v95, %v166
    %v168 = vpop.f32.mrb[0].mxu0
    %169 = vdwg.mxu0
    %v170 = vld [vmem:[%s1] sm:$0xff]
    %v171 = vld [vmem:[%s2] sm:$0xff]
    %v172 = vld [vmem:[%s3] sm:$0xff]
    %v173 = vmul.f32 %v167, %v170
    %175 = vrot.lane.b32.xlu0 %v167, 127
    %v176 = vpop.permute.xlu0 %175
    %178 = vrot.lane.b32.xlu0 %v167, 31
    %v179 = vpop.permute.xlu0 %178
    %vm181 = vcmask 252928
    %v182 = vsel %vm181, %v176, %v179
    %v183 = vmul.f32 %v182, %v171
    %v184 = vadd.f32 %v173, %v183
    %185 = vrot.lane.b32.xlu0 %v167, 97
    %v186 = vpop.permute.xlu0 %185
    %188 = vrot.lane.b32.xlu0 %v167, 1
    %v189 = vpop.permute.xlu0 %188
    %vm191 = vcmask 7168
    %v192 = vsel %vm191, %v186, %v189
    %v193 = vmul.f32 %v192, %v172
    %v194 = vadd.f32 %v184, %v193
    %196 = vrot.lane.b32.xlu0 %v170, 32
    %v197 = vpop.permute.xlu0 %196
    %v199 = vmul.f32 %v167, %v197
    %200 = vrot.lane.b32.xlu0 %v167, 95
    %v201 = vpop.permute.xlu0 %200
    %v203 = vsel %vm181, %v201, %v176
    %v204 = vmul.f32 %v203, %v171
    %206 = vrot.lane.b32.xlu0 %v204, 32
    %v207 = vpop.permute.xlu0 %206
    %v209 = vadd.f32 %v199, %v207
    %210 = vrot.lane.b32.xlu0 %v167, 65
    %v211 = vpop.permute.xlu0 %210
    %v213 = vsel %vm191, %v211, %v186
    %v214 = vmul.f32 %v213, %v172
    %216 = vrot.lane.b32.xlu0 %v214, 32
    %v217 = vpop.permute.xlu0 %216
    %v219 = vadd.f32 %v209, %v217
    %221 = vrot.lane.b32.xlu0 %v194, 120
    %v222 = vpop.permute.xlu0 %221
    %223 = vrot.lane.b32.xlu0 %v194, 112
    %v224 = vpop.permute.xlu0 %223
    %225 = vrot.lane.b32.xlu0 %v194, 104
    %v226 = vpop.permute.xlu0 %225
    %228 = vrot.lane.b32.xlu0 %v219, 120
    %v229 = vpop.permute.xlu0 %228
    %230 = vrot.lane.b32.xlu0 %v219, 112
    %v231 = vpop.permute.xlu0 %230
    %232 = vrot.lane.b32.xlu0 %v219, 104
    %v233 = vpop.permute.xlu0 %232
    %234 = vrot.lane.b32.xlu0 %v167, 120
    %v235 = vpop.permute.xlu0 %234
    %236 = vrot.lane.b32.xlu0 %v167, 112
    %v237 = vpop.permute.xlu0 %236
    %238 = vrot.lane.b32.xlu0 %v167, 104
    %v239 = vpop.permute.xlu0 %238
    %v240 = vlaneseq
    %v241 = vshrl.u32 %v240, 7
    %v242 = vlaneseq
    %v243 = vand.u32 %v242, 127
    %vm244 = vcmp.ge.s32.totalorder %v241, %v243
    %245 = vrot.lane.b32.xlu0 %v219, 96
    %v246 = vpop.permute.xlu0 %245
    %vm247 = vcmask 64512
    %v248 = vsel %vm247, %v194, 0
    %v250 = vsel %vm247, %v246, 0
    %252 = vmatprep.subr.mxu0 0.0
    %253 = vmatpush1.xpose.msra.mxu0 %v250
    %254 = vmatprep.subr.mxu0 0.0
    %255 = vmatpush1.xpose.msra.mxu0 0.0
    %256 = vmatprep.subr.mxu0 0.0
    %257 = vmatpush1.xpose.msra.mxu0 0.0
    %258 = vmatprep.subr.mxu0 0.0
    %259 = vmatpush1.xpose.msra.mxu0 0.0
    %260 = vmatprep.subr.mxu0 0.0
    %261 = vmatpush1.xpose.msra.mxu0 0.0
    %262 = vmatprep.subr.mxu0 0.0
    %263 = vmatpush1.xpose.msra.mxu0 0.0
    %264 = vmatprep.subr.mxu0 0.0
    %265 = vmatpush1.xpose.msra.mxu0 0.0
    %266 = vmatprep.subr.mxu0 0.0
    %267 = vmatpush1.xpose.msra.mxu0 0.0
    %268 = vmatprep.subr.mxu0 0.0
    %269 = vmatpush1.xpose.msra.mxu0 0.0
    %270 = vmatprep.subr.mxu0 0.0
    %271 = vmatpush1.xpose.msra.mxu0 0.0
    %272 = vmatprep.subr.mxu0 0.0
    %273 = vmatpush1.xpose.msra.mxu0 0.0
    %274 = vmatprep.subr.mxu0 0.0
    %275 = vmatpush1.xpose.msra.mxu0 0.0
    %276 = vmatprep.subr.mxu0 0.0
    %277 = vmatpush1.xpose.msra.mxu0 0.0
    %278 = vmatprep.subr.mxu0 0.0
    %279 = vmatpush1.xpose.msra.mxu0 0.0
    %280 = vmatprep.subr.mxu0 0.0
    %281 = vmatpush1.xpose.msra.mxu0 0.0
    %282 = vmatprep.subr.mxu0 0.0
    %283 = vmatpush1.xpose.msra.mxu0 0.0
    %284 = vmatprep.subr.mxu0 0.0
    %285 = vmatpush1.xpose.msra.mxu0 0.0
    %286 = vmatprep.subr.mxu0 0.0
    %287 = vmatpush1.xpose.msra.mxu0 0.0
    %288 = vmatprep.subr.mxu0 0.0
    %289 = vmatpush1.xpose.msra.mxu0 0.0
    %290 = vmatprep.subr.mxu0 0.0
    %291 = vmatpush1.xpose.msra.mxu0 0.0
    %292 = vmatprep.subr.mxu0 0.0
    %293 = vmatpush1.xpose.msra.mxu0 0.0
    %294 = vmatprep.subr.mxu0 0.0
    %295 = vmatpush1.xpose.msra.mxu0 0.0
    %296 = vmatprep.subr.mxu0 0.0
    %297 = vmatpush1.xpose.msra.mxu0 0.0
    %298 = vmatprep.subr.mxu0 0.0
    %299 = vmatpush1.xpose.msra.mxu0 0.0
    %300 = vmatprep.subr.mxu0 0.0
    %301 = vmatpush1.xpose.msra.mxu0 0.0
    %302 = vmatprep.subr.mxu0 0.0
    %303 = vmatpush1.xpose.msra.mxu0 0.0
    %304 = vmatprep.subr.mxu0 0.0
    %305 = vmatpush1.xpose.msra.mxu0 0.0
    %306 = vmatprep.subr.mxu0 0.0
    %307 = vmatpush1.xpose.msra.mxu0 0.0
    %308 = vmatprep.subr.mxu0 0.0
    %309 = vmatpush1.xpose.msra.mxu0 0.0
    %310 = vmatprep.subr.mxu0 0.0
    %311 = vmatpush1.xpose.msra.mxu0 0.0
    %312 = vmatprep.subr.mxu0 0.0
    %313 = vmatpush1.xpose.msra.mxu0 0.0
    %314 = vmatprep.subr.mxu0 0.0
    %315 = vmatpush1.xpose.msra.mxu0 0.0
    %316 = vmatprep.mubr.f32.mxu0 0.0
    %317 = vmatmul.mubr.f32.gmra.mrb[0].mxu0 %v248
    %v318 = vpop.f32.mrb[0].mxu0
    %v319 = vadd.f32 0.0, %v318
    %v320 = vpop.f32.mrb[0].mxu0
    %321 = vdwg.mxu0
    %322 = vrot.lane.b32.xlu0 %v229, 96
    %v323 = vpop.permute.xlu0 %322
    %v324 = vsel %vm247, %v222, 0
    %v326 = vsel %vm247, %v323, 0
    %328 = vmatprep.subr.mxu0 0.0
    %329 = vmatpush1.xpose.msra.mxu0 %v326
    %330 = vmatprep.subr.mxu0 0.0
    %331 = vmatpush1.xpose.msra.mxu0 0.0
    %332 = vmatprep.subr.mxu0 0.0
    %333 = vmatpush1.xpose.msra.mxu0 0.0
    %334 = vmatprep.subr.mxu0 0.0
    %335 = vmatpush1.xpose.msra.mxu0 0.0
    %336 = vmatprep.subr.mxu0 0.0
    %337 = vmatpush1.xpose.msra.mxu0 0.0
    %338 = vmatprep.subr.mxu0 0.0
    %339 = vmatpush1.xpose.msra.mxu0 0.0
    %340 = vmatprep.subr.mxu0 0.0
    %341 = vmatpush1.xpose.msra.mxu0 0.0
    %342 = vmatprep.subr.mxu0 0.0
    %343 = vmatpush1.xpose.msra.mxu0 0.0
    %344 = vmatprep.subr.mxu0 0.0
    %345 = vmatpush1.xpose.msra.mxu0 0.0
    %346 = vmatprep.subr.mxu0 0.0
    %347 = vmatpush1.xpose.msra.mxu0 0.0
    %348 = vmatprep.subr.mxu0 0.0
    %349 = vmatpush1.xpose.msra.mxu0 0.0
    %350 = vmatprep.subr.mxu0 0.0
    %351 = vmatpush1.xpose.msra.mxu0 0.0
    %352 = vmatprep.subr.mxu0 0.0
    %353 = vmatpush1.xpose.msra.mxu0 0.0
    %354 = vmatprep.subr.mxu0 0.0
    %355 = vmatpush1.xpose.msra.mxu0 0.0
    %356 = vmatprep.subr.mxu0 0.0
    %357 = vmatpush1.xpose.msra.mxu0 0.0
    %358 = vmatprep.subr.mxu0 0.0
    %359 = vmatpush1.xpose.msra.mxu0 0.0
    %360 = vmatprep.subr.mxu0 0.0
    %361 = vmatpush1.xpose.msra.mxu0 0.0
    %362 = vmatprep.subr.mxu0 0.0
    %363 = vmatpush1.xpose.msra.mxu0 0.0
    %364 = vmatprep.subr.mxu0 0.0
    %365 = vmatpush1.xpose.msra.mxu0 0.0
    %366 = vmatprep.subr.mxu0 0.0
    %367 = vmatpush1.xpose.msra.mxu0 0.0
    %368 = vmatprep.subr.mxu0 0.0
    %369 = vmatpush1.xpose.msra.mxu0 0.0
    %370 = vmatprep.subr.mxu0 0.0
    %371 = vmatpush1.xpose.msra.mxu0 0.0
    %372 = vmatprep.subr.mxu0 0.0
    %373 = vmatpush1.xpose.msra.mxu0 0.0
    %374 = vmatprep.subr.mxu0 0.0
    %375 = vmatpush1.xpose.msra.mxu0 0.0
    %376 = vmatprep.subr.mxu0 0.0
    %377 = vmatpush1.xpose.msra.mxu0 0.0
    %378 = vmatprep.subr.mxu0 0.0
    %379 = vmatpush1.xpose.msra.mxu0 0.0
    %380 = vmatprep.subr.mxu0 0.0
    %381 = vmatpush1.xpose.msra.mxu0 0.0
    %382 = vmatprep.subr.mxu0 0.0
    %383 = vmatpush1.xpose.msra.mxu0 0.0
    %384 = vmatprep.subr.mxu0 0.0
    %385 = vmatpush1.xpose.msra.mxu0 0.0
    %386 = vmatprep.subr.mxu0 0.0
    %387 = vmatpush1.xpose.msra.mxu0 0.0
    %388 = vmatprep.subr.mxu0 0.0
    %389 = vmatpush1.xpose.msra.mxu0 0.0
    %390 = vmatprep.subr.mxu0 0.0
    %391 = vmatpush1.xpose.msra.mxu0 0.0
    %392 = vmatprep.mubr.f32.mxu0 0.0
    %393 = vmatmul.mubr.f32.gmra.mrb[0].mxu0 %v324
    %v394 = vpop.f32.mrb[0].mxu0
    %v395 = vadd.f32 0.0, %v394
    %v396 = vpop.f32.mrb[0].mxu0
    %397 = vdwg.mxu0
    %398 = vrot.lane.b32.xlu0 %v231, 96
    %v399 = vpop.permute.xlu0 %398
    %v400 = vsel %vm247, %v224, 0
    %v402 = vsel %vm247, %v399, 0
    %404 = vmatprep.subr.mxu0 0.0
    %405 = vmatpush1.xpose.msra.mxu0 %v402
    %406 = vmatprep.subr.mxu0 0.0
    %407 = vmatpush1.xpose.msra.mxu0 0.0
    %408 = vmatprep.subr.mxu0 0.0
    %409 = vmatpush1.xpose.msra.mxu0 0.0
    %410 = vmatprep.subr.mxu0 0.0
    %411 = vmatpush1.xpose.msra.mxu0 0.0
    %412 = vmatprep.subr.mxu0 0.0
    %413 = vmatpush1.xpose.msra.mxu0 0.0
    %414 = vmatprep.subr.mxu0 0.0
    %415 = vmatpush1.xpose.msra.mxu0 0.0
    %416 = vmatprep.subr.mxu0 0.0
    %417 = vmatpush1.xpose.msra.mxu0 0.0
    %418 = vmatprep.subr.mxu0 0.0
    %419 = vmatpush1.xpose.msra.mxu0 0.0
    %420 = vmatprep.subr.mxu0 0.0
    %421 = vmatpush1.xpose.msra.mxu0 0.0
    %422 = vmatprep.subr.mxu0 0.0
    %423 = vmatpush1.xpose.msra.mxu0 0.0
    %424 = vmatprep.subr.mxu0 0.0
    %425 = vmatpush1.xpose.msra.mxu0 0.0
    %426 = vmatprep.subr.mxu0 0.0
    %427 = vmatpush1.xpose.msra.mxu0 0.0
    %428 = vmatprep.subr.mxu0 0.0
    %429 = vmatpush1.xpose.msra.mxu0 0.0
    %430 = vmatprep.subr.mxu0 0.0
    %431 = vmatpush1.xpose.msra.mxu0 0.0
    %432 = vmatprep.subr.mxu0 0.0
    %433 = vmatpush1.xpose.msra.mxu0 0.0
    %434 = vmatprep.subr.mxu0 0.0
    %435 = vmatpush1.xpose.msra.mxu0 0.0
    %436 = vmatprep.subr.mxu0 0.0
    %437 = vmatpush1.xpose.msra.mxu0 0.0
    %438 = vmatprep.subr.mxu0 0.0
    %439 = vmatpush1.xpose.msra.mxu0 0.0
    %440 = vmatprep.subr.mxu0 0.0
    %441 = vmatpush1.xpose.msra.mxu0 0.0
    %442 = vmatprep.subr.mxu0 0.0
    %443 = vmatpush1.xpose.msra.mxu0 0.0
    %444 = vmatprep.subr.mxu0 0.0
    %445 = vmatpush1.xpose.msra.mxu0 0.0
    %446 = vmatprep.subr.mxu0 0.0
    %447 = vmatpush1.xpose.msra.mxu0 0.0
    %448 = vmatprep.subr.mxu0 0.0
    %449 = vmatpush1.xpose.msra.mxu0 0.0
    %450 = vmatprep.subr.mxu0 0.0
    %451 = vmatpush1.xpose.msra.mxu0 0.0
    %452 = vmatprep.subr.mxu0 0.0
    %453 = vmatpush1.xpose.msra.mxu0 0.0
    %454 = vmatprep.subr.mxu0 0.0
    %455 = vmatpush1.xpose.msra.mxu0 0.0
    %456 = vmatprep.subr.mxu0 0.0
    %457 = vmatpush1.xpose.msra.mxu0 0.0
    %458 = vmatprep.subr.mxu0 0.0
    %459 = vmatpush1.xpose.msra.mxu0 0.0
    %460 = vmatprep.subr.mxu0 0.0
    %461 = vmatpush1.xpose.msra.mxu0 0.0
    %462 = vmatprep.subr.mxu0 0.0
    %463 = vmatpush1.xpose.msra.mxu0 0.0
    %464 = vmatprep.subr.mxu0 0.0
    %465 = vmatpush1.xpose.msra.mxu0 0.0
    %466 = vmatprep.subr.mxu0 0.0
    %467 = vmatpush1.xpose.msra.mxu0 0.0
    %468 = vmatprep.mubr.f32.mxu0 0.0
    %469 = vmatmul.mubr.f32.gmra.mrb[0].mxu0 %v400
    %v470 = vpop.f32.mrb[0].mxu0
    %v471 = vadd.f32 0.0, %v470
    %v472 = vpop.f32.mrb[0].mxu0
    %473 = vdwg.mxu0
    %474 = vrot.lane.b32.xlu0 %v233, 96
    %v475 = vpop.permute.xlu0 %474
    %v476 = vsel %vm247, %v226, 0
    %v478 = vsel %vm247, %v475, 0
    %480 = vmatprep.subr.mxu0 0.0
    %481 = vmatpush1.xpose.msra.mxu0 %v478
    %482 = vmatprep.subr.mxu0 0.0
    %483 = vmatpush1.xpose.msra.mxu0 0.0
    %484 = vmatprep.subr.mxu0 0.0
    %485 = vmatpush1.xpose.msra.mxu0 0.0
    %486 = vmatprep.subr.mxu0 0.0
    %487 = vmatpush1.xpose.msra.mxu0 0.0
    %488 = vmatprep.subr.mxu0 0.0
    %489 = vmatpush1.xpose.msra.mxu0 0.0
    %490 = vmatprep.subr.mxu0 0.0
    %491 = vmatpush1.xpose.msra.mxu0 0.0
    %492 = vmatprep.subr.mxu0 0.0
    %493 = vmatpush1.xpose.msra.mxu0 0.0
    %494 = vmatprep.subr.mxu0 0.0
    %495 = vmatpush1.xpose.msra.mxu0 0.0
    %496 = vmatprep.subr.mxu0 0.0
    %497 = vmatpush1.xpose.msra.mxu0 0.0
    %498 = vmatprep.subr.mxu0 0.0
    %499 = vmatpush1.xpose.msra.mxu0 0.0
    %500 = vmatprep.subr.mxu0 0.0
    %501 = vmatpush1.xpose.msra.mxu0 0.0
    %502 = vmatprep.subr.mxu0 0.0
    %503 = vmatpush1.xpose.msra.mxu0 0.0
    %504 = vmatprep.subr.mxu0 0.0
    %505 = vmatpush1.xpose.msra.mxu0 0.0
    %506 = vmatprep.subr.mxu0 0.0
    %507 = vmatpush1.xpose.msra.mxu0 0.0
    %508 = vmatprep.subr.mxu0 0.0
    %509 = vmatpush1.xpose.msra.mxu0 0.0
    %510 = vmatprep.subr.mxu0 0.0
    %511 = vmatpush1.xpose.msra.mxu0 0.0
    %512 = vmatprep.subr.mxu0 0.0
    %513 = vmatpush1.xpose.msra.mxu0 0.0
    %514 = vmatprep.subr.mxu0 0.0
    %515 = vmatpush1.xpose.msra.mxu0 0.0
    %516 = vmatprep.subr.mxu0 0.0
    %517 = vmatpush1.xpose.msra.mxu0 0.0
    %518 = vmatprep.subr.mxu0 0.0
    %519 = vmatpush1.xpose.msra.mxu0 0.0
    %520 = vmatprep.subr.mxu0 0.0
    %521 = vmatpush1.xpose.msra.mxu0 0.0
    %522 = vmatprep.subr.mxu0 0.0
    %523 = vmatpush1.xpose.msra.mxu0 0.0
    %524 = vmatprep.subr.mxu0 0.0
    %525 = vmatpush1.xpose.msra.mxu0 0.0
    %526 = vmatprep.subr.mxu0 0.0
    %527 = vmatpush1.xpose.msra.mxu0 0.0
    %528 = vmatprep.subr.mxu0 0.0
    %529 = vmatpush1.xpose.msra.mxu0 0.0
    %530 = vmatprep.subr.mxu0 0.0
    %531 = vmatpush1.xpose.msra.mxu0 0.0
    %532 = vmatprep.subr.mxu0 0.0
    %533 = vmatpush1.xpose.msra.mxu0 0.0
    %534 = vmatprep.subr.mxu0 0.0
    %535 = vmatpush1.xpose.msra.mxu0 0.0
    %536 = vmatprep.subr.mxu0 0.0
    %537 = vmatpush1.xpose.msra.mxu0 0.0
    %538 = vmatprep.subr.mxu0 0.0
    %539 = vmatpush1.xpose.msra.mxu0 0.0
    %540 = vmatprep.subr.mxu0 0.0
    %541 = vmatpush1.xpose.msra.mxu0 0.0
    %542 = vmatprep.subr.mxu0 0.0
    %543 = vmatpush1.xpose.msra.mxu0 0.0
    %544 = vmatprep.mubr.f32.mxu0 0.0
    %545 = vmatmul.mubr.f32.gmra.mrb[0].mxu0 %v476
    %v546 = vpop.f32.mrb[0].mxu0
    %v547 = vadd.f32 0.0, %v546
    %v548 = vpop.f32.mrb[0].mxu0
    %549 = vdwg.mxu0
    %v550 = vmul.f32 %v319, 0.35355338
    %v551 = vmul.f32 %v395, 0.35355338
    %v552 = vmul.f32 %v471, 0.35355338
    %v553 = vmul.f32 %v547, 0.35355338
    %v554 = vsel %vm244, 1, 0
    %vm555 = vcmp.eq.s32.totalorder %v554, 1
    %v556 = vsel %vm555, %v550, -1e+30
    %v557 = vsel %vm555, %v551, -1e+30
    %v558 = vsel %vm555, %v552, -1e+30
    %v559 = vsel %vm555, %v553, -1e+30
    %v560 = vsel %vm247, %v556, -inf
    %561 = vmax.xlane.f32.xlu0 %v560
    %v562 = vpop.xlane.xlu0 %561
    %v563 = vsel %vm247, %v557, -inf
    %564 = vmax.xlane.f32.xlu0 %v563
    %v565 = vpop.xlane.xlu0 %564
    %v566 = vsel %vm247, %v558, -inf
    %567 = vmax.xlane.f32.xlu0 %v566
    %v568 = vpop.xlane.xlu0 %567
    %v569 = vsel %vm247, %v559, -inf
    %570 = vmax.xlane.f32.xlu0 %v569
    %v571 = vpop.xlane.xlu0 %570
    %v572 = vsub.f32 %v556, %v562
    %v573 = vsub.f32 %v557, %v565
    %v574 = vsub.f32 %v558, %v568
    %v575 = vsub.f32 %v559, %v571
    %v576 = vmul.f32 %v572, 1.442695
    %v577 = vpow.pop %v576
    %v578 = vmul.f32 %v573, 1.442695
    %v579 = vpow.pop %v578
    %v580 = vmul.f32 %v574, 1.442695
    %v581 = vpow.pop %v580
    %v582 = vmul.f32 %v575, 1.442695
    %v583 = vpow.pop %v582
    %v584 = vsel %vm247, %v577, 0.0
    %585 = vadd.xlane.f32.xlu0 %v584
    %v586 = vpop.xlane.xlu0 %585
    %v587 = vsel %vm247, %v579, 0.0
    %588 = vadd.xlane.f32.xlu0 %v587
    %v589 = vpop.xlane.xlu0 %588
    %v590 = vsel %vm247, %v581, 0.0
    %591 = vadd.xlane.f32.xlu0 %v590
    %v592 = vpop.xlane.xlu0 %591
    %v593 = vsel %vm247, %v583, 0.0
    %594 = vadd.xlane.f32.xlu0 %v593
    %v595 = vpop.xlane.xlu0 %594
    %v596 = vrcp.pop %v586
    %v597 = vrcp.pop %v589
    %v598 = vrcp.pop %v592
    %v599 = vrcp.pop %v595
    %v600 = vmul.f32 %v577, %v596
    %v601 = vmul.f32 %v579, %v597
    %v602 = vmul.f32 %v581, %v598
    %v603 = vmul.f32 %v583, %v599
    %604 = vrot.lane.b32.xlu0 %v167, 64
    %v605 = vpop.permute.xlu0 %604
    %v608 = vsel %vm247, %v600, 0
    %610 = vmatprep.subr.mxu0 0.0
    %611 = vmatpush1.msra.mxu0 %v605
    %612 = vmatprep.subr.mxu0 0.0
    %613 = vmatpush1.msra.mxu0 0.0
    %614 = vmatprep.subr.mxu0 0.0
    %615 = vmatpush1.msra.mxu0 0.0
    %616 = vmatprep.subr.mxu0 0.0
    %617 = vmatpush1.msra.mxu0 0.0
    %618 = vmatprep.subr.mxu0 0.0
    %619 = vmatpush1.msra.mxu0 0.0
    %620 = vmatprep.subr.mxu0 0.0
    %621 = vmatpush1.msra.mxu0 0.0
    %622 = vmatprep.subr.mxu0 0.0
    %623 = vmatpush1.msra.mxu0 0.0
    %624 = vmatprep.subr.mxu0 0.0
    %625 = vmatpush1.msra.mxu0 0.0
    %626 = vmatprep.subr.mxu0 0.0
    %627 = vmatpush1.msra.mxu0 0.0
    %628 = vmatprep.subr.mxu0 0.0
    %629 = vmatpush1.msra.mxu0 0.0
    %630 = vmatprep.subr.mxu0 0.0
    %631 = vmatpush1.msra.mxu0 0.0
    %632 = vmatprep.subr.mxu0 0.0
    %633 = vmatpush1.msra.mxu0 0.0
    %634 = vmatprep.subr.mxu0 0.0
    %635 = vmatpush1.msra.mxu0 0.0
    %636 = vmatprep.subr.mxu0 0.0
    %637 = vmatpush1.msra.mxu0 0.0
    %638 = vmatprep.subr.mxu0 0.0
    %639 = vmatpush1.msra.mxu0 0.0
    %640 = vmatprep.subr.mxu0 0.0
    %641 = vmatpush1.msra.mxu0 0.0
    %642 = vmatprep.subr.mxu0 0.0
    %643 = vmatpush1.msra.mxu0 0.0
    %644 = vmatprep.subr.mxu0 0.0
    %645 = vmatpush1.msra.mxu0 0.0
    %646 = vmatprep.subr.mxu0 0.0
    %647 = vmatpush1.msra.mxu0 0.0
    %648 = vmatprep.subr.mxu0 0.0
    %649 = vmatpush1.msra.mxu0 0.0
    %650 = vmatprep.subr.mxu0 0.0
    %651 = vmatpush1.msra.mxu0 0.0
    %652 = vmatprep.subr.mxu0 0.0
    %653 = vmatpush1.msra.mxu0 0.0
    %654 = vmatprep.subr.mxu0 0.0
    %655 = vmatpush1.msra.mxu0 0.0
    %656 = vmatprep.subr.mxu0 0.0
    %657 = vmatpush1.msra.mxu0 0.0
    %658 = vmatprep.subr.mxu0 0.0
    %659 = vmatpush1.msra.mxu0 0.0
    %660 = vmatprep.subr.mxu0 0.0
    %661 = vmatpush1.msra.mxu0 0.0
    %662 = vmatprep.subr.mxu0 0.0
    %663 = vmatpush1.msra.mxu0 0.0
    %664 = vmatprep.subr.mxu0 0.0
    %665 = vmatpush1.msra.mxu0 0.0
    %666 = vmatprep.subr.mxu0 0.0
    %667 = vmatpush1.msra.mxu0 0.0
    %668 = vmatprep.subr.mxu0 0.0
    %669 = vmatpush1.msra.mxu0 0.0
    %670 = vmatprep.subr.mxu0 0.0
    %671 = vmatpush1.msra.mxu0 0.0
    %672 = vmatprep.subr.mxu0 0.0
    %673 = vmatpush1.msra.mxu0 0.0
    %674 = vmatprep.mubr.f32.mxu0 0.0
    %675 = vmatmul.mubr.f32.gmra.mrb[0].mxu0 %v608
    %v676 = vpop.f32.mrb[0].mxu0
    %v677 = vadd.f32 0.0, %v676
    %v678 = vpop.f32.mrb[0].mxu0
    %679 = vdwg.mxu0
    %680 = vrot.lane.b32.xlu0 %v235, 64
    %v681 = vpop.permute.xlu0 %680
    %v684 = vsel %vm247, %v601, 0
    %686 = vmatprep.subr.mxu0 0.0
    %687 = vmatpush1.msra.mxu0 %v681
    %688 = vmatprep.subr.mxu0 0.0
    %689 = vmatpush1.msra.mxu0 0.0
    %690 = vmatprep.subr.mxu0 0.0
    %691 = vmatpush1.msra.mxu0 0.0
    %692 = vmatprep.subr.mxu0 0.0
    %693 = vmatpush1.msra.mxu0 0.0
    %694 = vmatprep.subr.mxu0 0.0
    %695 = vmatpush1.msra.mxu0 0.0
    %696 = vmatprep.subr.mxu0 0.0
    %697 = vmatpush1.msra.mxu0 0.0
    %698 = vmatprep.subr.mxu0 0.0
    %699 = vmatpush1.msra.mxu0 0.0
    %700 = vmatprep.subr.mxu0 0.0
    %701 = vmatpush1.msra.mxu0 0.0
    %702 = vmatprep.subr.mxu0 0.0
    %703 = vmatpush1.msra.mxu0 0.0
    %704 = vmatprep.subr.mxu0 0.0
    %705 = vmatpush1.msra.mxu0 0.0
    %706 = vmatprep.subr.mxu0 0.0
    %707 = vmatpush1.msra.mxu0 0.0
    %708 = vmatprep.subr.mxu0 0.0
    %709 = vmatpush1.msra.mxu0 0.0
    %710 = vmatprep.subr.mxu0 0.0
    %711 = vmatpush1.msra.mxu0 0.0
    %712 = vmatprep.subr.mxu0 0.0
    %713 = vmatpush1.msra.mxu0 0.0
    %714 = vmatprep.subr.mxu0 0.0
    %715 = vmatpush1.msra.mxu0 0.0
    %716 = vmatprep.subr.mxu0 0.0
    %717 = vmatpush1.msra.mxu0 0.0
    %718 = vmatprep.subr.mxu0 0.0
    %719 = vmatpush1.msra.mxu0 0.0
    %720 = vmatprep.subr.mxu0 0.0
    %721 = vmatpush1.msra.mxu0 0.0
    %722 = vmatprep.subr.mxu0 0.0
    %723 = vmatpush1.msra.mxu0 0.0
    %724 = vmatprep.subr.mxu0 0.0
    %725 = vmatpush1.msra.mxu0 0.0
    %726 = vmatprep.subr.mxu0 0.0
    %727 = vmatpush1.msra.mxu0 0.0
    %728 = vmatprep.subr.mxu0 0.0
    %729 = vmatpush1.msra.mxu0 0.0
    %730 = vmatprep.subr.mxu0 0.0
    %731 = vmatpush1.msra.mxu0 0.0
    %732 = vmatprep.subr.mxu0 0.0
    %733 = vmatpush1.msra.mxu0 0.0
    %734 = vmatprep.subr.mxu0 0.0
    %735 = vmatpush1.msra.mxu0 0.0
    %736 = vmatprep.subr.mxu0 0.0
    %737 = vmatpush1.msra.mxu0 0.0
    %738 = vmatprep.subr.mxu0 0.0
    %739 = vmatpush1.msra.mxu0 0.0
    %740 = vmatprep.subr.mxu0 0.0
    %741 = vmatpush1.msra.mxu0 0.0
    %742 = vmatprep.subr.mxu0 0.0
    %743 = vmatpush1.msra.mxu0 0.0
    %744 = vmatprep.subr.mxu0 0.0
    %745 = vmatpush1.msra.mxu0 0.0
    %746 = vmatprep.subr.mxu0 0.0
    %747 = vmatpush1.msra.mxu0 0.0
    %748 = vmatprep.subr.mxu0 0.0
    %749 = vmatpush1.msra.mxu0 0.0
    %750 = vmatprep.mubr.f32.mxu0 0.0
    %751 = vmatmul.mubr.f32.gmra.mrb[0].mxu0 %v684
    %v752 = vpop.f32.mrb[0].mxu0
    %v753 = vadd.f32 0.0, %v752
    %v754 = vpop.f32.mrb[0].mxu0
    %755 = vdwg.mxu0
    %756 = vrot.lane.b32.xlu0 %v237, 64
    %v757 = vpop.permute.xlu0 %756
    %v760 = vsel %vm247, %v602, 0
    %762 = vmatprep.subr.mxu0 0.0
    %763 = vmatpush1.msra.mxu0 %v757
    %764 = vmatprep.subr.mxu0 0.0
    %765 = vmatpush1.msra.mxu0 0.0
    %766 = vmatprep.subr.mxu0 0.0
    %767 = vmatpush1.msra.mxu0 0.0
    %768 = vmatprep.subr.mxu0 0.0
    %769 = vmatpush1.msra.mxu0 0.0
    %770 = vmatprep.subr.mxu0 0.0
    %771 = vmatpush1.msra.mxu0 0.0
    %772 = vmatprep.subr.mxu0 0.0
    %773 = vmatpush1.msra.mxu0 0.0
    %774 = vmatprep.subr.mxu0 0.0
    %775 = vmatpush1.msra.mxu0 0.0
    %776 = vmatprep.subr.mxu0 0.0
    %777 = vmatpush1.msra.mxu0 0.0
    %778 = vmatprep.subr.mxu0 0.0
    %779 = vmatpush1.msra.mxu0 0.0
    %780 = vmatprep.subr.mxu0 0.0
    %781 = vmatpush1.msra.mxu0 0.0
    %782 = vmatprep.subr.mxu0 0.0
    %783 = vmatpush1.msra.mxu0 0.0
    %784 = vmatprep.subr.mxu0 0.0
    %785 = vmatpush1.msra.mxu0 0.0
    %786 = vmatprep.subr.mxu0 0.0
    %787 = vmatpush1.msra.mxu0 0.0
    %788 = vmatprep.subr.mxu0 0.0
    %789 = vmatpush1.msra.mxu0 0.0
    %790 = vmatprep.subr.mxu0 0.0
    %791 = vmatpush1.msra.mxu0 0.0
    %792 = vmatprep.subr.mxu0 0.0
    %793 = vmatpush1.msra.mxu0 0.0
    %794 = vmatprep.subr.mxu0 0.0
    %795 = vmatpush1.msra.mxu0 0.0
    %796 = vmatprep.subr.mxu0 0.0
    %797 = vmatpush1.msra.mxu0 0.0
    %798 = vmatprep.subr.mxu0 0.0
    %799 = vmatpush1.msra.mxu0 0.0
    %800 = vmatprep.subr.mxu0 0.0
    %801 = vmatpush1.msra.mxu0 0.0
    %802 = vmatprep.subr.mxu0 0.0
    %803 = vmatpush1.msra.mxu0 0.0
    %804 = vmatprep.subr.mxu0 0.0
    %805 = vmatpush1.msra.mxu0 0.0
    %806 = vmatprep.subr.mxu0 0.0
    %807 = vmatpush1.msra.mxu0 0.0
    %808 = vmatprep.subr.mxu0 0.0
    %809 = vmatpush1.msra.mxu0 0.0
    %810 = vmatprep.subr.mxu0 0.0
    %811 = vmatpush1.msra.mxu0 0.0
    %812 = vmatprep.subr.mxu0 0.0
    %813 = vmatpush1.msra.mxu0 0.0
    %814 = vmatprep.subr.mxu0 0.0
    %815 = vmatpush1.msra.mxu0 0.0
    %816 = vmatprep.subr.mxu0 0.0
    %817 = vmatpush1.msra.mxu0 0.0
    %818 = vmatprep.subr.mxu0 0.0
    %819 = vmatpush1.msra.mxu0 0.0
    %820 = vmatprep.subr.mxu0 0.0
    %821 = vmatpush1.msra.mxu0 0.0
    %822 = vmatprep.subr.mxu0 0.0
    %823 = vmatpush1.msra.mxu0 0.0
    %824 = vmatprep.subr.mxu0 0.0
    %825 = vmatpush1.msra.mxu0 0.0
    %826 = vmatprep.mubr.f32.mxu0 0.0
    %827 = vmatmul.mubr.f32.gmra.mrb[0].mxu0 %v760
    %v828 = vpop.f32.mrb[0].mxu0
    %v829 = vadd.f32 0.0, %v828
    %v830 = vpop.f32.mrb[0].mxu0
    %831 = vdwg.mxu0
    %832 = vrot.lane.b32.xlu0 %v239, 64
    %v833 = vpop.permute.xlu0 %832
    %v836 = vsel %vm247, %v603, 0
    %838 = vmatprep.subr.mxu0 0.0
    %839 = vmatpush1.msra.mxu0 %v833
    %840 = vmatprep.subr.mxu0 0.0
    %841 = vmatpush1.msra.mxu0 0.0
    %842 = vmatprep.subr.mxu0 0.0
    %843 = vmatpush1.msra.mxu0 0.0
    %844 = vmatprep.subr.mxu0 0.0
    %845 = vmatpush1.msra.mxu0 0.0
    %846 = vmatprep.subr.mxu0 0.0
    %847 = vmatpush1.msra.mxu0 0.0
    %848 = vmatprep.subr.mxu0 0.0
    %849 = vmatpush1.msra.mxu0 0.0
    %850 = vmatprep.subr.mxu0 0.0
    %851 = vmatpush1.msra.mxu0 0.0
    %852 = vmatprep.subr.mxu0 0.0
    %853 = vmatpush1.msra.mxu0 0.0
    %854 = vmatprep.subr.mxu0 0.0
    %855 = vmatpush1.msra.mxu0 0.0
    %856 = vmatprep.subr.mxu0 0.0
    %857 = vmatpush1.msra.mxu0 0.0
    %858 = vmatprep.subr.mxu0 0.0
    %859 = vmatpush1.msra.mxu0 0.0
    %860 = vmatprep.subr.mxu0 0.0
    %861 = vmatpush1.msra.mxu0 0.0
    %862 = vmatprep.subr.mxu0 0.0
    %863 = vmatpush1.msra.mxu0 0.0
    %864 = vmatprep.subr.mxu0 0.0
    %865 = vmatpush1.msra.mxu0 0.0
    %866 = vmatprep.subr.mxu0 0.0
    %867 = vmatpush1.msra.mxu0 0.0
    %868 = vmatprep.subr.mxu0 0.0
    %869 = vmatpush1.msra.mxu0 0.0
    %870 = vmatprep.subr.mxu0 0.0
    %871 = vmatpush1.msra.mxu0 0.0
    %872 = vmatprep.subr.mxu0 0.0
    %873 = vmatpush1.msra.mxu0 0.0
    %874 = vmatprep.subr.mxu0 0.0
    %875 = vmatpush1.msra.mxu0 0.0
    %876 = vmatprep.subr.mxu0 0.0
    %877 = vmatpush1.msra.mxu0 0.0
    %878 = vmatprep.subr.mxu0 0.0
    %879 = vmatpush1.msra.mxu0 0.0
    %880 = vmatprep.subr.mxu0 0.0
    %881 = vmatpush1.msra.mxu0 0.0
    %882 = vmatprep.subr.mxu0 0.0
    %883 = vmatpush1.msra.mxu0 0.0
    %884 = vmatprep.subr.mxu0 0.0
    %885 = vmatpush1.msra.mxu0 0.0
    %886 = vmatprep.subr.mxu0 0.0
    %887 = vmatpush1.msra.mxu0 0.0
    %888 = vmatprep.subr.mxu0 0.0
    %889 = vmatpush1.msra.mxu0 0.0
    %890 = vmatprep.subr.mxu0 0.0
    %891 = vmatpush1.msra.mxu0 0.0
    %892 = vmatprep.subr.mxu0 0.0
    %893 = vmatpush1.msra.mxu0 0.0
    %894 = vmatprep.subr.mxu0 0.0
    %895 = vmatpush1.msra.mxu0 0.0
    %896 = vmatprep.subr.mxu0 0.0
    %897 = vmatpush1.msra.mxu0 0.0
    %898 = vmatprep.subr.mxu0 0.0
    %899 = vmatpush1.msra.mxu0 0.0
    %900 = vmatprep.subr.mxu0 0.0
    %901 = vmatpush1.msra.mxu0 0.0
    %902 = vmatprep.mubr.f32.mxu0 0.0
    %903 = vmatmul.mubr.f32.gmra.mrb[0].mxu0 %v836
    %v904 = vpop.f32.mrb[0].mxu0
    %v905 = vadd.f32 0.0, %v904
    %v906 = vpop.f32.mrb[0].mxu0
    %907 = vdwg.mxu0
    %909 = vrot.lane.b32.xlu0 %v753, 8
    %v910 = vpop.permute.xlu0 %909
    %913 = vrot.lane.b32.xlu0 %v829, 16
    %v914 = vpop.permute.xlu0 %913
    %917 = vrot.lane.b32.xlu0 %v905, 24
    %v918 = vpop.permute.xlu0 %917
    %v920 = vsel %vm247, %v677, %v910
    %vm921 = vcmask 130048
    %v922 = vsel %vm921, %v920, %v914
    %vm923 = vcmask 195584
    %v924 = vsel %vm923, %v922, %v918
    %v925 = vld [vmem:[%s10] sm:$0xff]
    %v926 = vld [vmem:[%s10 + $0x8] sm:$0xff]
    %v927 = vld [vmem:[%s10 + $0x10] sm:$0xff]
    %v928 = vld [vmem:[%s10 + $0x18] sm:$0xff]
    %v929 = vld [vmem:[%s11] sm:$0x1]
    %v931 = vlaneseq
    %v932 = vshrl.u32 %v931, 7
    %v933 = vsub.s32 0, %v932
    %v934 = vrot.slane %v929, %v933
    %v937 = vsel %vm55, %v924, 0
    %939 = vmatprep.subr.mxu0 0.0
    %940 = vmatpush1.msra.mxu0 %v925
    %941 = vmatprep.subr.mxu0 0.0
    %942 = vmatpush1.msra.mxu0 %v926
    %943 = vmatprep.subr.mxu0 0.0
    %944 = vmatpush1.msra.mxu0 %v927
    %945 = vmatprep.subr.mxu0 0.0
    %946 = vmatpush1.msra.mxu0 %v928
    %947 = vmatprep.subr.mxu0 0.0
    %948 = vmatpush1.msra.mxu0 0.0
    %949 = vmatprep.subr.mxu0 0.0
    %950 = vmatpush1.msra.mxu0 0.0
    %951 = vmatprep.subr.mxu0 0.0
    %952 = vmatpush1.msra.mxu0 0.0
    %953 = vmatprep.subr.mxu0 0.0
    %954 = vmatpush1.msra.mxu0 0.0
    %955 = vmatprep.subr.mxu0 0.0
    %956 = vmatpush1.msra.mxu0 0.0
    %957 = vmatprep.subr.mxu0 0.0
    %958 = vmatpush1.msra.mxu0 0.0
    %959 = vmatprep.subr.mxu0 0.0
    %960 = vmatpush1.msra.mxu0 0.0
    %961 = vmatprep.subr.mxu0 0.0
    %962 = vmatpush1.msra.mxu0 0.0
    %963 = vmatprep.subr.mxu0 0.0
    %964 = vmatpush1.msra.mxu0 0.0
    %965 = vmatprep.subr.mxu0 0.0
    %966 = vmatpush1.msra.mxu0 0.0
    %967 = vmatprep.subr.mxu0 0.0
    %968 = vmatpush1.msra.mxu0 0.0
    %969 = vmatprep.subr.mxu0 0.0
    %970 = vmatpush1.msra.mxu0 0.0
    %971 = vmatprep.subr.mxu0 0.0
    %972 = vmatpush1.msra.mxu0 0.0
    %973 = vmatprep.subr.mxu0 0.0
    %974 = vmatpush1.msra.mxu0 0.0
    %975 = vmatprep.subr.mxu0 0.0
    %976 = vmatpush1.msra.mxu0 0.0
    %977 = vmatprep.subr.mxu0 0.0
    %978 = vmatpush1.msra.mxu0 0.0
    %979 = vmatprep.subr.mxu0 0.0
    %980 = vmatpush1.msra.mxu0 0.0
    %981 = vmatprep.subr.mxu0 0.0
    %982 = vmatpush1.msra.mxu0 0.0
    %983 = vmatprep.subr.mxu0 0.0
    %984 = vmatpush1.msra.mxu0 0.0
    %985 = vmatprep.subr.mxu0 0.0
    %986 = vmatpush1.msra.mxu0 0.0
    %987 = vmatprep.subr.mxu0 0.0
    %988 = vmatpush1.msra.mxu0 0.0
    %989 = vmatprep.subr.mxu0 0.0
    %990 = vmatpush1.msra.mxu0 0.0
    %991 = vmatprep.subr.mxu0 0.0
    %992 = vmatpush1.msra.mxu0 0.0
    %993 = vmatprep.subr.mxu0 0.0
    %994 = vmatpush1.msra.mxu0 0.0
    %995 = vmatprep.subr.mxu0 0.0
    %996 = vmatpush1.msra.mxu0 0.0
    %997 = vmatprep.subr.mxu0 0.0
    %998 = vmatpush1.msra.mxu0 0.0
    %999 = vmatprep.subr.mxu0 0.0
    %1000 = vmatpush1.msra.mxu0 0.0
    %1001 = vmatprep.subr.mxu0 0.0
    %1002 = vmatpush1.msra.mxu0 0.0
    %1003 = vmatprep.mubr.f32.mxu0 0.0
    %1004 = vmatmul.mubr.f32.gmra.mrb[0].mxu0 %v937
    %v1005 = vpop.f32.mrb[0].mxu0
    %v1006 = vadd.f32 %v934, %v1005
    %v1007 = vpop.f32.mrb[0].mxu0
    %1008 = vdwg.mxu0
    %v1009 = vld [vmem:[%s6] sm:$0x1]
    %v1011 = vlaneseq
    %v1012 = vshrl.u32 %v1011, 7
    %v1013 = vsub.s32 0, %v1012
    %v1014 = vrot.slane %v1009, %v1013
    %v1016 = vmul.f32 %v69, %v1014
    %v1017 = vld [vmem:[%s7] sm:$0x1]
    %v1019 = vlaneseq
    %v1020 = vshrl.u32 %v1019, 7
    %v1021 = vsub.s32 0, %v1020
    %v1022 = vrot.slane %v1017, %v1021
    %v1024 = vadd.f32 %v1016, %v1022
    %v1025 = vld [vmem:[%s12] sm:$0xff]
    %v1026 = vld [vmem:[%s12 + $0x8] sm:$0xff]
    %v1027 = vld [vmem:[%s12 + $0x10] sm:$0xff]
    %v1028 = vld [vmem:[%s12 + $0x18] sm:$0xff]
    %v1029 = vld [vmem:[%s13] sm:$0x1]
    %v1031 = vlaneseq
    %v1032 = vshrl.u32 %v1031, 7
    %v1033 = vsub.s32 0, %v1032
    %v1034 = vrot.slane %v1029, %v1033
    %v1037 = vsel %vm55, %v1024, 0
    %1039 = vmatprep.subr.mxu0 0.0
    %1040 = vmatpush1.msra.mxu0 %v1025
    %1041 = vmatprep.subr.mxu0 0.0
    %1042 = vmatpush1.msra.mxu0 %v1026
    %1043 = vmatprep.subr.mxu0 0.0
    %1044 = vmatpush1.msra.mxu0 %v1027
    %1045 = vmatprep.subr.mxu0 0.0
    %1046 = vmatpush1.msra.mxu0 %v1028
    %1047 = vmatprep.subr.mxu0 0.0
    %1048 = vmatpush1.msra.mxu0 0.0
    %1049 = vmatprep.subr.mxu0 0.0
    %1050 = vmatpush1.msra.mxu0 0.0
    %1051 = vmatprep.subr.mxu0 0.0
    %1052 = vmatpush1.msra.mxu0 0.0
    %1053 = vmatprep.subr.mxu0 0.0
    %1054 = vmatpush1.msra.mxu0 0.0
    %1055 = vmatprep.subr.mxu0 0.0
    %1056 = vmatpush1.msra.mxu0 0.0
    %1057 = vmatprep.subr.mxu0 0.0
    %1058 = vmatpush1.msra.mxu0 0.0
    %1059 = vmatprep.subr.mxu0 0.0
    %1060 = vmatpush1.msra.mxu0 0.0
    %1061 = vmatprep.subr.mxu0 0.0
    %1062 = vmatpush1.msra.mxu0 0.0
    %1063 = vmatprep.subr.mxu0 0.0
    %1064 = vmatpush1.msra.mxu0 0.0
    %1065 = vmatprep.subr.mxu0 0.0
    %1066 = vmatpush1.msra.mxu0 0.0
    %1067 = vmatprep.subr.mxu0 0.0
    %1068 = vmatpush1.msra.mxu0 0.0
    %1069 = vmatprep.subr.mxu0 0.0
    %1070 = vmatpush1.msra.mxu0 0.0
    %1071 = vmatprep.subr.mxu0 0.0
    %1072 = vmatpush1.msra.mxu0 0.0
    %1073 = vmatprep.subr.mxu0 0.0
    %1074 = vmatpush1.msra.mxu0 0.0
    %1075 = vmatprep.subr.mxu0 0.0
    %1076 = vmatpush1.msra.mxu0 0.0
    %1077 = vmatprep.subr.mxu0 0.0
    %1078 = vmatpush1.msra.mxu0 0.0
    %1079 = vmatprep.subr.mxu0 0.0
    %1080 = vmatpush1.msra.mxu0 0.0
    %1081 = vmatprep.subr.mxu0 0.0
    %1082 = vmatpush1.msra.mxu0 0.0
    %1083 = vmatprep.subr.mxu0 0.0
    %1084 = vmatpush1.msra.mxu0 0.0
    %1085 = vmatprep.subr.mxu0 0.0
    %1086 = vmatpush1.msra.mxu0 0.0
    %1087 = vmatprep.subr.mxu0 0.0
    %1088 = vmatpush1.msra.mxu0 0.0
    %1089 = vmatprep.subr.mxu0 0.0
    %1090 = vmatpush1.msra.mxu0 0.0
    %1091 = vmatprep.subr.mxu0 0.0
    %1092 = vmatpush1.msra.mxu0 0.0
    %1093 = vmatprep.subr.mxu0 0.0
    %1094 = vmatpush1.msra.mxu0 0.0
    %1095 = vmatprep.subr.mxu0 0.0
    %1096 = vmatpush1.msra.mxu0 0.0
    %1097 = vmatprep.subr.mxu0 0.0
    %1098 = vmatpush1.msra.mxu0 0.0
    %1099 = vmatprep.subr.mxu0 0.0
    %1100 = vmatpush1.msra.mxu0 0.0
    %1101 = vmatprep.subr.mxu0 0.0
    %1102 = vmatpush1.msra.mxu0 0.0
    %1103 = vmatprep.mubr.f32.mxu0 0.0
    %1104 = vmatmul.mubr.f32.gmra.mrb[0].mxu0 %v1037
    %v1105 = vpop.f32.mrb[0].mxu0
    %v1106 = vadd.f32 %v1034, %v1105
    %v1107 = vpop.f32.mrb[0].mxu0
    %1108 = vdwg.mxu0
    %v1109 = vmul.f32 %v1106, 0.5
    %v1110 = vrcp.pop 1.4142135
    %v1111 = vmul.f32 %v1106, %v1110
    %vm1112 = vcmp.ge.f32.partialorder %v1111, 0.0
    %v1113 = vsel %vm1112, 1.0, -1.0
    %v1114 = vand.u32 2147483647, %v1111
    %v1115 = vmul.f32 %v1114, 0.3275911
    %v1116 = vadd.f32 %v1115, 1.0
    %v1117 = vrcp.pop %v1116
    %v1118 = vmul.f32 1.0, %v1117
    %v1119 = vmul.f32 %v1118, 1.0614054
    %v1120 = vadd.f32 %v1119, -1.4531521
    %v1121 = vmul.f32 %v1120, %v1118
    %v1122 = vadd.f32 %v1121, 1.4214138
    %v1123 = vmul.f32 %v1122, %v1118
    %v1124 = vadd.f32 %v1123, -0.28449672
    %v1125 = vmul.f32 %v1124, %v1118
    %v1126 = vadd.f32 %v1125, 0.2548296
    %v1127 = vmul.f32 %v1126, %v1118
    %v1128 = vsub.f32 0.0, %v1114
    %v1129 = vmul.f32 %v1128, %v1114
    %v1130 = vmul.f32 %v1129, 1.442695
    %v1131 = vpow.pop %v1130
    %v1132 = vmul.f32 %v1127, %v1131
    %v1133 = vsub.f32 1.0, %v1132
    %v1134 = vmul.f32 %v1113, %v1133
    %v1135 = vadd.f32 %v1134, 1.0
    %v1136 = vmul.f32 %v1109, %v1135
    %v1137 = vld [vmem:[%s14] sm:$0xff]
    %v1138 = vld [vmem:[%s14 + $0x8] sm:$0xff]
    %v1139 = vld [vmem:[%s14 + $0x10] sm:$0xff]
    %v1140 = vld [vmem:[%s14 + $0x18] sm:$0xff]
    %v1141 = vld [vmem:[%s14 + $0x20] sm:$0xff]
    %v1142 = vld [vmem:[%s14 + $0x28] sm:$0xff]
    %v1143 = vld [vmem:[%s14 + $0x30] sm:$0xff]
    %v1144 = vld [vmem:[%s14 + $0x38] sm:$0xff]
    %v1145 = vld [vmem:[%s14 + $0x40] sm:$0xff]
    %v1146 = vld [vmem:[%s14 + $0x48] sm:$0xff]
    %v1147 = vld [vmem:[%s14 + $0x50] sm:$0xff]
    %v1148 = vld [vmem:[%s14 + $0x58] sm:$0xff]
    %v1149 = vld [vmem:[%s14 + $0x60] sm:$0xff]
    %v1150 = vld [vmem:[%s14 + $0x68] sm:$0xff]
    %v1151 = vld [vmem:[%s14 + $0x70] sm:$0xff]
    %v1152 = vld [vmem:[%s14 + $0x78] sm:$0xff]
    %v1153 = vld [vmem:[%s15] sm:$0x1]
    %v1155 = vlaneseq
    %v1156 = vshrl.u32 %v1155, 7
    %v1157 = vsub.s32 0, %v1156
    %v1158 = vrot.slane %v1153, %v1157
    %1160 = vmatprep.subr.mxu0 0.0
    %1161 = vmatpush1.msra.mxu0 %v1137
    %1162 = vmatprep.subr.mxu0 0.0
    %1163 = vmatpush1.msra.mxu0 %v1138
    %1164 = vmatprep.subr.mxu0 0.0
    %1165 = vmatpush1.msra.mxu0 %v1139
    %1166 = vmatprep.subr.mxu0 0.0
    %1167 = vmatpush1.msra.mxu0 %v1140
    %1168 = vmatprep.subr.mxu0 0.0
    %1169 = vmatpush1.msra.mxu0 %v1141
    %1170 = vmatprep.subr.mxu0 0.0
    %1171 = vmatpush1.msra.mxu0 %v1142
    %1172 = vmatprep.subr.mxu0 0.0
    %1173 = vmatpush1.msra.mxu0 %v1143
    %1174 = vmatprep.subr.mxu0 0.0
    %1175 = vmatpush1.msra.mxu0 %v1144
    %1176 = vmatprep.subr.mxu0 0.0
    %1177 = vmatpush1.msra.mxu0 %v1145
    %1178 = vmatprep.subr.mxu0 0.0
    %1179 = vmatpush1.msra.mxu0 %v1146
    %1180 = vmatprep.subr.mxu0 0.0
    %1181 = vmatpush1.msra.mxu0 %v1147
    %1182 = vmatprep.subr.mxu0 0.0
    %1183 = vmatpush1.msra.mxu0 %v1148
    %1184 = vmatprep.subr.mxu0 0.0
    %1185 = vmatpush1.msra.mxu0 %v1149
    %1186 = vmatprep.subr.mxu0 0.0
    %1187 = vmatpush1.msra.mxu0 %v1150
    %1188 = vmatprep.subr.mxu0 0.0
    %1189 = vmatpush1.msra.mxu0 %v1151
    %1190 = vmatprep.subr.mxu0 0.0
    %1191 = vmatpush1.msra.mxu0 %v1152
    %1192 = vmatprep.subr.mxu0 0.0
    %1193 = vmatpush1.msra.mxu0 0.0
    %1194 = vmatprep.subr.mxu0 0.0
    %1195 = vmatpush1.msra.mxu0 0.0
    %1196 = vmatprep.subr.mxu0 0.0
    %1197 = vmatpush1.msra.mxu0 0.0
    %1198 = vmatprep.subr.mxu0 0.0
    %1199 = vmatpush1.msra.mxu0 0.0
    %1200 = vmatprep.subr.mxu0 0.0
    %1201 = vmatpush1.msra.mxu0 0.0
    %1202 = vmatprep.subr.mxu0 0.0
    %1203 = vmatpush1.msra.mxu0 0.0
    %1204 = vmatprep.subr.mxu0 0.0
    %1205 = vmatpush1.msra.mxu0 0.0
    %1206 = vmatprep.subr.mxu0 0.0
    %1207 = vmatpush1.msra.mxu0 0.0
    %1208 = vmatprep.subr.mxu0 0.0
    %1209 = vmatpush1.msra.mxu0 0.0
    %1210 = vmatprep.subr.mxu0 0.0
    %1211 = vmatpush1.msra.mxu0 0.0
    %1212 = vmatprep.subr.mxu0 0.0
    %1213 = vmatpush1.msra.mxu0 0.0
    %1214 = vmatprep.subr.mxu0 0.0
    %1215 = vmatpush1.msra.mxu0 0.0
    %1216 = vmatprep.subr.mxu0 0.0
    %1217 = vmatpush1.msra.mxu0 0.0
    %1218 = vmatprep.subr.mxu0 0.0
    %1219 = vmatpush1.msra.mxu0 0.0
    %1220 = vmatprep.subr.mxu0 0.0
    %1221 = vmatpush1.msra.mxu0 0.0
    %1222 = vmatprep.subr.mxu0 0.0
    %1223 = vmatpush1.msra.mxu0 0.0
    %1224 = vmatprep.mubr.f32.mxu0 0.0
    %1225 = vmatmul.mubr.f32.gmra.mrb[0].mxu0 %v1136
    %v1226 = vpop.f32.mrb[0].mxu0
    %v1227 = vadd.f32 %v1158, %v1226
    %v1228 = vpop.f32.mrb[0].mxu0
    %1229 = vdwg.mxu0
    %v1230 = vadd.f32 %v1227, %v1006
    %v1231 = vadd.f32 %v1230, %v54
    %1232 = vst.msk [vmem:[#allocation2] sm:$0xff] %vm55, %v1231
    // Predicated region
    $region66: #{gpt_neox_layer.1} parent=1 // pred_check
      _
    $region67: #{gpt_neox_layer.1} parent=1 // pred_check_branch
      %1234 = sbr.rel (0) target = $region69
    $region68: #{gpt_neox_layer.1} parent=1 // pred_region
      %s1236 = ssub.s32 128, 128
      %1237 = vsyncadd [#allocation3], %s1236
      %s1239 = sshll.u32 [#allocation2], 4
      %s1240 = int_to_ptr.vmem [resolvable:$true] %s1239
      %1242 = dma.vmem_to_hbm [thread:$0]  %s1240, 128, %s16, [#allocation3]
    $region69: #{gpt_neox_layer.1} parent=1 // pred_fallthru
      _
    // Predicated region
    $region70: #{gpt_neox_layer.1} parent=1 // pred_check
      _
    $region71: #{gpt_neox_layer.1} parent=1 // pred_check_branch
      %1244 = sbr.rel (0) target = $region73
    $region72: #{gpt_neox_layer.1} parent=1 // pred_region
      %1245 = dma.done [#allocation3], 128
    $region73: #{gpt_neox_layer.1} parent=1 // pred_fallthru
      _
    %1246 = vsyncpa [#allocation3], 1

</llo_original>
